<compile_context>
chip_gen: v7x
topology: tpu7x:2x2x1
jax: 0.10.0
libtpu: 0.0.40
codegen_flags: <defaults>
</compile_context>

<pallas_src>
import math

import jax
import jax.numpy as jnp
import numpy as np
from jax import lax
from jax.experimental import pallas as pl
from jax.experimental.pallas import tpu as pltpu


# ----------------------------------------------------------------------------
# Fused Pallas kernel (runs once for the whole batch)
# ----------------------------------------------------------------------------
def _fused_cnn_kernel(lhs1_ref, m1_ref, b1_ref, m2_ref, b2_ref,
                      wfc_ref, bfc_ref, o_ref, lhs2_sc, flat_sc):
    f32 = jnp.float32
    n_img = o_ref.shape[0]

    # ---- conv1 + bias + relu: single MXU matmul (K = 3*18*3 = 162) ----------
    # LHS rows ordered (e1, n, e2, t) with conv1 output row oh = 4t + 2e2 + e1;
    # RHS columns ordered (ew, v, c_out) with output col ow = 2v + ew.
    c1 = jnp.dot(lhs1_ref[...], m1_ref[...], preferred_element_type=f32)
    r1 = jnp.maximum(c1 + b1_ref[...], 0.0)                 # (16N, 512)

    # ---- maxpool1 (2x2): max over e1 row halves, max over ew column halves --
    half1 = 8 * n_img
    h1 = jnp.maximum(r1[:half1], r1[half1:])                # (8N, 512)
    p1 = jnp.maximum(h1[:, :256], h1[:, 256:])              # (8N, 256)
    # p1 row n*8 + e2*4 + t  <->  pooled-H index u = 2t + e2,
    # p1 col v*32 + c        <->  pooled-W index v, conv1 channel c.

    # ---- build conv2 LHS in VMEM scratch (8N, 768) ---------------------------
    # Row (e2'*4N + n*4 + t2) is conv2 output row oh2 = 2*t2 + e2' of image n;
    # lane block ki holds padded pooled row s = 2*t2 + e2' + ki with the same
    # (v, c) column order conv2's slab-K expects.  Only the H-pad rows are
    # written as zeros; every other scratch element is overwritten each call.
    zrow = jnp.zeros((1, 256), f32)
    for n in range(n_img):
        ev = p1[n * 8:n * 8 + 4]        # u even -> padded pooled rows 1,3,5,7
        od = p1[n * 8 + 4:n * 8 + 8]    # u odd  -> padded pooled rows 2,4,6,8
        rb = n * 4                      # e2' = 0 block
        lhs2_sc[rb:rb + 1, 0:256] = zrow                  # padded row 0 (zero)
        lhs2_sc[rb + 1:rb + 4, 0:256] = od[0:3]           # padded rows 2,4,6
        lhs2_sc[rb:rb + 4, 256:512] = ev                  # padded rows 1,3,5,7
        lhs2_sc[rb:rb + 4, 512:768] = od                  # padded rows 2,4,6,8
        rb = 4 * n_img + n * 4          # e2' = 1 block
        lhs2_sc[rb:rb + 4, 0:256] = ev                    # padded rows 1,3,5,7
        lhs2_sc[rb:rb + 4, 256:512] = od                  # padded rows 2,4,6,8
        lhs2_sc[rb:rb + 3, 512:768] = ev[1:4]             # padded rows 3,5,7
        lhs2_sc[rb + 3:rb + 4, 512:768] = zrow            # padded row 9 (zero)

    # ---- conv2 + bias + relu: single matmul (K = 3*8*32 = 768) --------------
    lhs2 = lhs2_sc[...].astype(jnp.bfloat16)
    c2 = jnp.dot(lhs2, m2_ref[...], preferred_element_type=f32)
    r2 = jnp.maximum(c2 + b2_ref[...], 0.0)                 # (8N, 512)

    # ---- maxpool2 (2x2) ------------------------------------------------------
    half2 = 4 * n_img
    h2 = jnp.maximum(r2[:half2], r2[half2:])                # (4N, 512)
    act = jnp.maximum(h2[:, :256], h2[:, 256:])             # (4N, 256)
    # act row n*4 + h (pooled H), col w*64 + c (pooled W, conv2 channel).

    # ---- flatten (NCHW .view baked into wfc) + fc: single matmul ------------
    for n in range(n_img):
        for h in range(4):
            flat_sc[n:n + 1, h * 256:(h + 1) * 256] = \
                act[n * 4 + h:n * 4 + h + 1]
    o_ref[...] = (jnp.dot(flat_sc[...], wfc_ref[...],
                          preferred_element_type=f32) + bfc_ref[...])


# ----------------------------------------------------------------------------
# One-time weight preprocessing (pure XLA, runs once -- not per forward step)
# ----------------------------------------------------------------------------
def _conv_slab_weights(w_oihw, in_wp, w_out):
    """Expand an OIHW 3x3 kernel into per-ki banded matrices for the
    (H, W*C) slab formulation.

    Returns (KH, len(in_wp)*C_in, w_out*C_out).  Output columns are ordered
    (ow parity, ow//2, c_out) so 2x max-pooling over W is a max of halves."""
    C_out, C_in, KH, KW = w_oihw.shape
    assert w_out % 2 == 0
    in_wp = np.asarray(in_wp)
    ow = 2 * np.arange(w_out // 2)[None, :] + np.arange(2)[:, None]   # (2, W/2)
    kj = in_wp[:, None, None] - ow[None, :, :]                        # (P, 2, W/2)
    valid = (kj >= 0) & (kj < KW)
    kj_c = np.clip(kj, 0, KW - 1)
    w_t = jnp.transpose(w_oihw, (2, 3, 1, 0))          # (KH, KW, C_in, C_out)
    g = w_t[:, kj_c, :, :]                             # (KH, P, 2, W/2, C_in, C_out)
    g = jnp.where(jnp.asarray(valid)[None, :, :, :, None, None], g, 0.0)
    g = jnp.transpose(g, (0, 1, 4, 2, 3, 5))           # (KH, P, C_in, 2, W/2, C_out)
    return g.reshape(KH, in_wp.shape[0] * C_in, w_out * C_out)


def prepare_fused_params(params):
    """Rearrange PyTorch-layout weights into the fused kernel's layout."""
    w1, b1 = params["w1"], params["b1"]       # (32, 3, 3, 3), (32,)
    w2, b2 = params["w2"], params["b2"]       # (64, 32, 3, 3), (64,)
    wfc, bfc = params["wfc"], params["bfc"]   # (10, 1024), (10,)

    # Banded slab RHS with the three ki taps concatenated along K, stored bf16.
    m1 = _conv_slab_weights(w1, np.arange(18), 16).reshape(162, 512)
    m2 = _conv_slab_weights(w2, np.arange(1, 9), 8).reshape(768, 512)
    b1s = jnp.tile(b1, 16).reshape(1, 512)
    b2s = jnp.tile(b2, 8).reshape(1, 512)

    # fc weight in the kernel's flatten order (h*256 + w*64 + c), baking in
    # PyTorch's NCHW .view(); natural 10-wide shape (no zero-lane DMA).
    wr = jnp.transpose(wfc.reshape(10, 64, 4, 4), (2, 3, 1, 0)).reshape(1024, 10)
    return dict(m1=m1.astype(jnp.bfloat16), b1=b1s,
                m2=m2.astype(jnp.bfloat16), b2=b2s,
                wfc=wr, bfc=bfc.reshape(1, 10))


# ----------------------------------------------------------------------------
# Forward pass: single pallas_call, whole batch in one grid step
# ----------------------------------------------------------------------------
@jax.jit
def cnn_forward_fused(fused, x_nchw):
    N, C, H, W = x_nchw.shape
    assert (C, H, W) == (3, 16, 16), (C, H, W)

    # Tiny per-call input staging (a few fused XLA ops on ~20 KB): builds the
    # conv1 LHS directly so the in-kernel conv1 is one MXU matmul with the
    # 3x3 ki loop already folded into the contraction dimension.
    x = jnp.transpose(x_nchw, (0, 2, 3, 1))                 # (N, 16, 16, 3)
    xp = jnp.pad(x, ((0, 0), (1, 1), (1, 1), (0, 0)))       # (N, 18, 18, 3)
    rows = xp.reshape(N, 18, 54)                            # padded rows (q, c)
    win = jnp.concatenate([rows[:, 0:16], rows[:, 1:17], rows[:, 2:18]],
                          axis=-1)                          # (N, 16, 162), row oh
    # Reorder rows to (e1, n, e2, t) with oh = 4t + 2e2 + e1 so maxpool1 over
    # H is a single max of the two 8N-row halves and the surviving rows are
    # already grouped by the parity maxpool2 needs.
    lhs1 = jnp.transpose(win.reshape(N, 4, 2, 2, 162),
                         (3, 0, 2, 1, 4)).reshape(16 * N, 162)
    lhs1 = lhs1.astype(jnp.bfloat16)

    out = pl.pallas_call(
        _fused_cnn_kernel,
        out_shape=jax.ShapeDtypeStruct((N, 10), jnp.float32),
        grid=(1,),                       # whole batch in one step (batch in M)
        in_specs=[
            pl.BlockSpec((16 * N, 162), lambda i: (0, 0)),   # conv1 LHS (bf16)
            pl.BlockSpec((162, 512), lambda i: (0, 0)),      # conv1 slab (bf16)
            pl.BlockSpec((1, 512), lambda i: (0, 0)),        # b1 slab
            pl.BlockSpec((768, 512), lambda i: (0, 0)),      # conv2 slab (bf16)
            pl.BlockSpec((1, 512), lambda i: (0, 0)),        # b2 slab
            pl.BlockSpec((1024, 10), lambda i: (0, 0)),      # fc weight (f32)
            pl.BlockSpec((1, 10), lambda i: (0, 0)),         # fc bias
        ],
        out_specs=pl.BlockSpec((N, 10), lambda i: (0, 0)),
        scratch_shapes=[pltpu.VMEM((8 * N, 768), jnp.float32),  # conv2 LHS
                        pltpu.VMEM((N, 1024), jnp.float32)],    # fc LHS
    )(lhs1, fused["m1"], fused["b1"], fused["m2"], fused["b2"],
      fused["wfc"], fused["bfc"])
    return out


# ----------------------------------------------------------------------------
# Parameter init (PyTorch-style uniform) and pure-JAX reference
# ----------------------------------------------------------------------------
def init_params(key, kernel_size, image_chw):
    C_in, H, W = image_chw
    k = kernel_size
    keys = jax.random.split(key, 6)

    def u(key, shape, fan_in):
        bound = 1.0 / math.sqrt(fan_in)
        return jax.random.uniform(key, shape, jnp.float32, -bound, bound)

    w1 = u(keys[0], (32, C_in, k, k), C_in * k * k)
    b1 = u(keys[1], (32,), C_in * k * k)
    w2 = u(keys[2], (64, 32, k, k), 32 * k * k)
    b2 = u(keys[3], (64,), 32 * k * k)
    fc_in = 64 * (H // 4) * (W // 4)
    wfc = u(keys[4], (10, fc_in), fc_in)
    bfc = u(keys[5], (10,), fc_in)
    return dict(w1=w1, b1=b1, w2=w2, b2=b2, wfc=wfc, bfc=bfc)


def cnn_reference(params, x_nchw, *, stride=1, pad=1):
    def conv(x, w, b):
        y = lax.conv_general_dilated(
            x, w, (stride, stride), [(pad, pad), (pad, pad)],
            dimension_numbers=("NCHW", "OIHW", "NCHW"),
            precision=lax.Precision.HIGHEST)
        return jnp.maximum(y + b.reshape(1, -1, 1, 1), 0.0)

    def pool(x):
        return lax.reduce_window(x, -jnp.inf, lax.max,
                                 (1, 1, 2, 2), (1, 1, 2, 2), "VALID")

    out = pool(conv(x_nchw, params["w1"], params["b1"]))
    out = pool(conv(out, params["w2"], params["b2"]))
    flat = out.reshape(out.shape[0], -1)
    return jnp.dot(flat, params["wfc"].T,
                   precision=lax.Precision.HIGHEST) + params["bfc"]


if __name__ == "__main__":
    KERNEL_SIZE, POOL_SIZE, PAD, STRIDE = 3, 2, 1, 1
    N, C, H, W = 2, 3, 16, 16   # image_dim = (2, 3, 16, 16)

    key = jax.random.PRNGKey(0)
    pkey, xkey = jax.random.split(key)
    params = init_params(pkey, KERNEL_SIZE, (C, H, W))
    x = jax.random.normal(xkey, (N, C, H, W), jnp.float32)

    fused = prepare_fused_params(params)        # one-time weight preprocessing
    out = cnn_forward_fused(fused, x)
    out = jax.block_until_ready(out)
    assert out.shape == (N, 10), out.shape

    ref = jax.block_until_ready(cnn_reference(params, x, stride=STRIDE, pad=PAD))
    # Conv weight slabs and conv LHS run on the MXU in bf16 (f32 accumulation),
    # so compare against the f32 reference at a bf16-appropriate tolerance.
    max_err = float(jnp.max(jnp.abs(out - ref)))
    assert jnp.allclose(out, ref, rtol=2e-2, atol=2e-2), max_err

    print("KERNEL_OK")
</pallas_src>

<mosaic_0001>
module attributes {stable_mosaic.version = 11 : i64} {
  func.func @_fused_cnn_kernel(%arg0: i32, %arg1: memref<32x162xbf16, #tpu.memory_space<vmem>>, %arg2: memref<162x512xbf16, #tpu.memory_space<vmem>>, %arg3: memref<1x512xf32, #tpu.memory_space<vmem>>, %arg4: memref<768x512xbf16, #tpu.memory_space<vmem>>, %arg5: memref<1x512xf32, #tpu.memory_space<vmem>>, %arg6: memref<1024x10xf32, #tpu.memory_space<vmem>>, %arg7: memref<1x10xf32, #tpu.memory_space<vmem>>, %arg8: memref<2x10xf32, #tpu.memory_space<vmem>>, %arg9: memref<16x768xf32, #tpu.memory_space<vmem>>, %arg10: memref<2x1024xf32, #tpu.memory_space<vmem>>) attributes {dimension_semantics = [#tpu.dimension_semantics<arbitrary>], iteration_bounds = array<i64: 1>, scalar_prefetch = 0 : i64, scratch_operands = 2 : i64, tpu.core_type = #tpu.core_type<tc>, window_params = [{pipeline_mode = #tpu.pipeline_mode<synchronous>, transform_indices = @transform_0, window_bounds = array<i64: 32, 162>}, {pipeline_mode = #tpu.pipeline_mode<synchronous>, transform_indices = @transform_1, window_bounds = array<i64: 162, 512>}, {pipeline_mode = #tpu.pipeline_mode<synchronous>, transform_indices = @transform_2, window_bounds = array<i64: 1, 512>}, {pipeline_mode = #tpu.pipeline_mode<synchronous>, transform_indices = @transform_3, window_bounds = array<i64: 768, 512>}, {pipeline_mode = #tpu.pipeline_mode<synchronous>, transform_indices = @transform_4, window_bounds = array<i64: 1, 512>}, {pipeline_mode = #tpu.pipeline_mode<synchronous>, transform_indices = @transform_5, window_bounds = array<i64: 1024, 10>}, {pipeline_mode = #tpu.pipeline_mode<synchronous>, transform_indices = @transform_6, window_bounds = array<i64: 1, 10>}, {pipeline_mode = #tpu.pipeline_mode<synchronous>, transform_indices = @transform_7, window_bounds = array<i64: 2, 10>}]} {
    %c0 = arith.constant 0 : index
    %c0_0 = arith.constant 0 : index
    %0 = vector.load %arg1[%c0, %c0_0] : memref<32x162xbf16, #tpu.memory_space<vmem>>, vector<32x162xbf16>
    %c0_1 = arith.constant 0 : index
    %c0_2 = arith.constant 0 : index
    %1 = vector.load %arg2[%c0_1, %c0_2] : memref<162x512xbf16, #tpu.memory_space<vmem>>, vector<162x512xbf16>
    %cst = arith.constant dense<0.000000e+00> : vector<32x512xf32>
    %2 = tpu.matmul %0, %1, %cst {dimension_numbers = #tpu.dot_dimension_numbers<[1], [0], [0], [1], [0, 0, 1, 1], [], []>} : vector<32x162xbf16>, vector<162x512xbf16>, vector<32x512xf32> -> vector<32x512xf32>
    %c0_3 = arith.constant 0 : index
    %c0_4 = arith.constant 0 : index
    %3 = vector.load %arg3[%c0_3, %c0_4] : memref<1x512xf32, #tpu.memory_space<vmem>>, vector<1x512xf32>
    %4 = vector.broadcast %3 : vector<1x512xf32> to vector<32x512xf32>
    %5 = arith.addf %2, %4 : vector<32x512xf32>
    %cst_5 = arith.constant 0.000000e+00 : f32
    %6 = vector.broadcast %cst_5 : f32 to vector<32x512xf32>
    %7 = arith.maximumf %5, %6 : vector<32x512xf32>
    %8 = vector.extract_strided_slice %7 {offsets = [0, 0], sizes = [16, 512], strides = [1, 1]} : vector<32x512xf32> to vector<16x512xf32>
    %9 = vector.extract_strided_slice %7 {offsets = [16, 0], sizes = [16, 512], strides = [1, 1]} : vector<32x512xf32> to vector<16x512xf32>
    %10 = arith.maximumf %8, %9 : vector<16x512xf32>
    %11 = vector.extract_strided_slice %10 {offsets = [0, 0], sizes = [16, 256], strides = [1, 1]} : vector<16x512xf32> to vector<16x256xf32>
    %12 = vector.extract_strided_slice %10 {offsets = [0, 256], sizes = [16, 256], strides = [1, 1]} : vector<16x512xf32> to vector<16x256xf32>
    %13 = arith.maximumf %11, %12 : vector<16x256xf32>
    %cst_6 = arith.constant 0.000000e+00 : f32
    %14 = vector.broadcast %cst_6 : f32 to vector<1x256xf32>
    %15 = vector.extract_strided_slice %13 {offsets = [0, 0], sizes = [4, 256], strides = [1, 1]} : vector<16x256xf32> to vector<4x256xf32>
    %16 = vector.extract_strided_slice %13 {offsets = [4, 0], sizes = [4, 256], strides = [1, 1]} : vector<16x256xf32> to vector<4x256xf32>
    %c0_7 = arith.constant 0 : index
    %c0_8 = arith.constant 0 : index
    %17 = vector.load %arg9[%c0_7, %c0_8] : memref<16x768xf32, #tpu.memory_space<vmem>>, vector<1x256xf32>
    tpu.vector_store %arg9[%c0_7, %c0_8], %14 {strides = array<i32>} : memref<16x768xf32, #tpu.memory_space<vmem>>, vector<1x256xf32>,
    %18 = vector.extract_strided_slice %16 {offsets = [0, 0], sizes = [3, 256], strides = [1, 1]} : vector<4x256xf32> to vector<3x256xf32>
    %c1 = arith.constant 1 : index
    %c0_9 = arith.constant 0 : index
    %19 = vector.load %arg9[%c1, %c0_9] : memref<16x768xf32, #tpu.memory_space<vmem>>, vector<3x256xf32>
    tpu.vector_store %arg9[%c1, %c0_9], %18 {strides = array<i32>} : memref<16x768xf32, #tpu.memory_space<vmem>>, vector<3x256xf32>,
    %c0_10 = arith.constant 0 : index
    %c256 = arith.constant 256 : index
    %20 = vector.load %arg9[%c0_10, %c256] : memref<16x768xf32, #tpu.memory_space<vmem>>, vector<4x256xf32>
    tpu.vector_store %arg9[%c0_10, %c256], %15 {strides = array<i32>} : memref<16x768xf32, #tpu.memory_space<vmem>>, vector<4x256xf32>,
    %c0_11 = arith.constant 0 : index
    %c512 = arith.constant 512 : index
    %21 = vector.load %arg9[%c0_11, %c512] : memref<16x768xf32, #tpu.memory_space<vmem>>, vector<4x256xf32>
    tpu.vector_store %arg9[%c0_11, %c512], %16 {strides = array<i32>} : memref<16x768xf32, #tpu.memory_space<vmem>>, vector<4x256xf32>,
    %c8 = arith.constant 8 : index
    %c0_12 = arith.constant 0 : index
    %22 = vector.load %arg9[%c8, %c0_12] : memref<16x768xf32, #tpu.memory_space<vmem>>, vector<4x256xf32>
    tpu.vector_store %arg9[%c8, %c0_12], %15 {strides = array<i32>} : memref<16x768xf32, #tpu.memory_space<vmem>>, vector<4x256xf32>,
    %c8_13 = arith.constant 8 : index
    %c256_14 = arith.constant 256 : index
    %23 = vector.load %arg9[%c8_13, %c256_14] : memref<16x768xf32, #tpu.memory_space<vmem>>, vector<4x256xf32>
    tpu.vector_store %arg9[%c8_13, %c256_14], %16 {strides = array<i32>} : memref<16x768xf32, #tpu.memory_space<vmem>>, vector<4x256xf32>,
    %24 = vector.extract_strided_slice %15 {offsets = [1, 0], sizes = [3, 256], strides = [1, 1]} : vector<4x256xf32> to vector<3x256xf32>
    %c8_15 = arith.constant 8 : index
    %c512_16 = arith.constant 512 : index
    %25 = vector.load %arg9[%c8_15, %c512_16] : memref<16x768xf32, #tpu.memory_space<vmem>>, vector<3x256xf32>
    tpu.vector_store %arg9[%c8_15, %c512_16], %24 {strides = array<i32>} : memref<16x768xf32, #tpu.memory_space<vmem>>, vector<3x256xf32>,
    %c11 = arith.constant 11 : index
    %c512_17 = arith.constant 512 : index
    %26 = vector.load %arg9[%c11, %c512_17] : memref<16x768xf32, #tpu.memory_space<vmem>>, vector<1x256xf32>
    tpu.vector_store %arg9[%c11, %c512_17], %14 {strides = array<i32>} : memref<16x768xf32, #tpu.memory_space<vmem>>, vector<1x256xf32>,
    %27 = vector.extract_strided_slice %13 {offsets = [8, 0], sizes = [4, 256], strides = [1, 1]} : vector<16x256xf32> to vector<4x256xf32>
    %28 = vector.extract_strided_slice %13 {offsets = [12, 0], sizes = [4, 256], strides = [1, 1]} : vector<16x256xf32> to vector<4x256xf32>
    %c4 = arith.constant 4 : index
    %c0_18 = arith.constant 0 : index
    %29 = vector.load %arg9[%c4, %c0_18] : memref<16x768xf32, #tpu.memory_space<vmem>>, vector<1x256xf32>
    tpu.vector_store %arg9[%c4, %c0_18], %14 {strides = array<i32>} : memref<16x768xf32, #tpu.memory_space<vmem>>, vector<1x256xf32>,
    %30 = vector.extract_strided_slice %28 {offsets = [0, 0], sizes = [3, 256], strides = [1, 1]} : vector<4x256xf32> to vector<3x256xf32>
    %c5 = arith.constant 5 : index
    %c0_19 = arith.constant 0 : index
    %31 = vector.load %arg9[%c5, %c0_19] : memref<16x768xf32, #tpu.memory_space<vmem>>, vector<3x256xf32>
    tpu.vector_store %arg9[%c5, %c0_19], %30 {strides = array<i32>} : memref<16x768xf32, #tpu.memory_space<vmem>>, vector<3x256xf32>,
    %c4_20 = arith.constant 4 : index
    %c256_21 = arith.constant 256 : index
    %32 = vector.load %arg9[%c4_20, %c256_21] : memref<16x768xf32, #tpu.memory_space<vmem>>, vector<4x256xf32>
    tpu.vector_store %arg9[%c4_20, %c256_21], %27 {strides = array<i32>} : memref<16x768xf32, #tpu.memory_space<vmem>>, vector<4x256xf32>,
    %c4_22 = arith.constant 4 : index
    %c512_23 = arith.constant 512 : index
    %33 = vector.load %arg9[%c4_22, %c512_23] : memref<16x768xf32, #tpu.memory_space<vmem>>, vector<4x256xf32>
    tpu.vector_store %arg9[%c4_22, %c512_23], %28 {strides = array<i32>} : memref<16x768xf32, #tpu.memory_space<vmem>>, vector<4x256xf32>,
    %c12 = arith.constant 12 : index
    %c0_24 = arith.constant 0 : index
    %34 = vector.load %arg9[%c12, %c0_24] : memref<16x768xf32, #tpu.memory_space<vmem>>, vector<4x256xf32>
    tpu.vector_store %arg9[%c12, %c0_24], %27 {strides = array<i32>} : memref<16x768xf32, #tpu.memory_space<vmem>>, vector<4x256xf32>,
    %c12_25 = arith.constant 12 : index
    %c256_26 = arith.constant 256 : index
    %35 = vector.load %arg9[%c12_25, %c256_26] : memref<16x768xf32, #tpu.memory_space<vmem>>, vector<4x256xf32>
    tpu.vector_store %arg9[%c12_25, %c256_26], %28 {strides = array<i32>} : memref<16x768xf32, #tpu.memory_space<vmem>>, vector<4x256xf32>,
    %36 = vector.extract_strided_slice %27 {offsets = [1, 0], sizes = [3, 256], strides = [1, 1]} : vector<4x256xf32> to vector<3x256xf32>
    %c12_27 = arith.constant 12 : index
    %c512_28 = arith.constant 512 : index
    %37 = vector.load %arg9[%c12_27, %c512_28] : memref<16x768xf32, #tpu.memory_space<vmem>>, vector<3x256xf32>
    tpu.vector_store %arg9[%c12_27, %c512_28], %36 {strides = array<i32>} : memref<16x768xf32, #tpu.memory_space<vmem>>, vector<3x256xf32>,
    %c15 = arith.constant 15 : index
    %c512_29 = arith.constant 512 : index
    %38 = vector.load %arg9[%c15, %c512_29] : memref<16x768xf32, #tpu.memory_space<vmem>>, vector<1x256xf32>
    tpu.vector_store %arg9[%c15, %c512_29], %14 {strides = array<i32>} : memref<16x768xf32, #tpu.memory_space<vmem>>, vector<1x256xf32>,
    %c0_30 = arith.constant 0 : index
    %c0_31 = arith.constant 0 : index
    %39 = vector.load %arg9[%c0_30, %c0_31] : memref<16x768xf32, #tpu.memory_space<vmem>>, vector<16x768xf32>
    %40 = arith.truncf %39 : vector<16x768xf32> to vector<16x768xbf16>
    %c0_32 = arith.constant 0 : index
    %c0_33 = arith.constant 0 : index
    %41 = vector.load %arg4[%c0_32, %c0_33] : memref<768x512xbf16, #tpu.memory_space<vmem>>, vector<768x512xbf16>
    %cst_34 = arith.constant dense<0.000000e+00> : vector<16x512xf32>
    %42 = tpu.matmul %40, %41, %cst_34 {dimension_numbers = #tpu.dot_dimension_numbers<[1], [0], [0], [1], [0, 0, 1, 1], [], []>} : vector<16x768xbf16>, vector<768x512xbf16>, vector<16x512xf32> -> vector<16x512xf32>
    %c0_35 = arith.constant 0 : index
    %c0_36 = arith.constant 0 : index
    %43 = vector.load %arg5[%c0_35, %c0_36] : memref<1x512xf32, #tpu.memory_space<vmem>>, vector<1x512xf32>
    %44 = vector.broadcast %43 : vector<1x512xf32> to vector<16x512xf32>
    %45 = arith.addf %42, %44 : vector<16x512xf32>
    %cst_37 = arith.constant 0.000000e+00 : f32
    %46 = vector.broadcast %cst_37 : f32 to vector<16x512xf32>
    %47 = arith.maximumf %45, %46 : vector<16x512xf32>
    %48 = vector.extract_strided_slice %47 {offsets = [0, 0], sizes = [8, 512], strides = [1, 1]} : vector<16x512xf32> to vector<8x512xf32>
    %49 = vector.extract_strided_slice %47 {offsets = [8, 0], sizes = [8, 512], strides = [1, 1]} : vector<16x512xf32> to vector<8x512xf32>
    %50 = arith.maximumf %48, %49 : vector<8x512xf32>
    %51 = vector.extract_strided_slice %50 {offsets = [0, 0], sizes = [8, 256], strides = [1, 1]} : vector<8x512xf32> to vector<8x256xf32>
    %52 = vector.extract_strided_slice %50 {offsets = [0, 256], sizes = [8, 256], strides = [1, 1]} : vector<8x512xf32> to vector<8x256xf32>
    %53 = arith.maximumf %51, %52 : vector<8x256xf32>
    %54 = vector.extract_strided_slice %53 {offsets = [0, 0], sizes = [1, 256], strides = [1, 1]} : vector<8x256xf32> to vector<1x256xf32>
    %c0_38 = arith.constant 0 : index
    %c0_39 = arith.constant 0 : index
    %55 = vector.load %arg10[%c0_38, %c0_39] : memref<2x1024xf32, #tpu.memory_space<vmem>>, vector<1x256xf32>
    tpu.vector_store %arg10[%c0_38, %c0_39], %54 {strides = array<i32>} : memref<2x1024xf32, #tpu.memory_space<vmem>>, vector<1x256xf32>,
    %56 = vector.extract_strided_slice %53 {offsets = [1, 0], sizes = [1, 256], strides = [1, 1]} : vector<8x256xf32> to vector<1x256xf32>
    %c0_40 = arith.constant 0 : index
    %c256_41 = arith.constant 256 : index
    %57 = vector.load %arg10[%c0_40, %c256_41] : memref<2x1024xf32, #tpu.memory_space<vmem>>, vector<1x256xf32>
    tpu.vector_store %arg10[%c0_40, %c256_41], %56 {strides = array<i32>} : memref<2x1024xf32, #tpu.memory_space<vmem>>, vector<1x256xf32>,
    %58 = vector.extract_strided_slice %53 {offsets = [2, 0], sizes = [1, 256], strides = [1, 1]} : vector<8x256xf32> to vector<1x256xf32>
    %c0_42 = arith.constant 0 : index
    %c512_43 = arith.constant 512 : index
    %59 = vector.load %arg10[%c0_42, %c512_43] : memref<2x1024xf32, #tpu.memory_space<vmem>>, vector<1x256xf32>
    tpu.vector_store %arg10[%c0_42, %c512_43], %58 {strides = array<i32>} : memref<2x1024xf32, #tpu.memory_space<vmem>>, vector<1x256xf32>,
    %60 = vector.extract_strided_slice %53 {offsets = [3, 0], sizes = [1, 256], strides = [1, 1]} : vector<8x256xf32> to vector<1x256xf32>
    %c0_44 = arith.constant 0 : index
    %c768 = arith.constant 768 : index
    %61 = vector.load %arg10[%c0_44, %c768] : memref<2x1024xf32, #tpu.memory_space<vmem>>, vector<1x256xf32>
    tpu.vector_store %arg10[%c0_44, %c768], %60 {strides = array<i32>} : memref<2x1024xf32, #tpu.memory_space<vmem>>, vector<1x256xf32>,
    %62 = vector.extract_strided_slice %53 {offsets = [4, 0], sizes = [1, 256], strides = [1, 1]} : vector<8x256xf32> to vector<1x256xf32>
    %c1_45 = arith.constant 1 : index
    %c0_46 = arith.constant 0 : index
    %63 = vector.load %arg10[%c1_45, %c0_46] : memref<2x1024xf32, #tpu.memory_space<vmem>>, vector<1x256xf32>
    tpu.vector_store %arg10[%c1_45, %c0_46], %62 {strides = array<i32>} : memref<2x1024xf32, #tpu.memory_space<vmem>>, vector<1x256xf32>,
    %64 = vector.extract_strided_slice %53 {offsets = [5, 0], sizes = [1, 256], strides = [1, 1]} : vector<8x256xf32> to vector<1x256xf32>
    %c1_47 = arith.constant 1 : index
    %c256_48 = arith.constant 256 : index
    %65 = vector.load %arg10[%c1_47, %c256_48] : memref<2x1024xf32, #tpu.memory_space<vmem>>, vector<1x256xf32>
    tpu.vector_store %arg10[%c1_47, %c256_48], %64 {strides = array<i32>} : memref<2x1024xf32, #tpu.memory_space<vmem>>, vector<1x256xf32>,
    %66 = vector.extract_strided_slice %53 {offsets = [6, 0], sizes = [1, 256], strides = [1, 1]} : vector<8x256xf32> to vector<1x256xf32>
    %c1_49 = arith.constant 1 : index
    %c512_50 = arith.constant 512 : index
    %67 = vector.load %arg10[%c1_49, %c512_50] : memref<2x1024xf32, #tpu.memory_space<vmem>>, vector<1x256xf32>
    tpu.vector_store %arg10[%c1_49, %c512_50], %66 {strides = array<i32>} : memref<2x1024xf32, #tpu.memory_space<vmem>>, vector<1x256xf32>,
    %68 = vector.extract_strided_slice %53 {offsets = [7, 0], sizes = [1, 256], strides = [1, 1]} : vector<8x256xf32> to vector<1x256xf32>
    %c1_51 = arith.constant 1 : index
    %c768_52 = arith.constant 768 : index
    %69 = vector.load %arg10[%c1_51, %c768_52] : memref<2x1024xf32, #tpu.memory_space<vmem>>, vector<1x256xf32>
    tpu.vector_store %arg10[%c1_51, %c768_52], %68 {strides = array<i32>} : memref<2x1024xf32, #tpu.memory_space<vmem>>, vector<1x256xf32>,
    %c0_53 = arith.constant 0 : index
    %c0_54 = arith.constant 0 : index
    %70 = vector.load %arg10[%c0_53, %c0_54] : memref<2x1024xf32, #tpu.memory_space<vmem>>, vector<2x1024xf32>
    %c0_55 = arith.constant 0 : index
    %c0_56 = arith.constant 0 : index
    %71 = vector.load %arg6[%c0_55, %c0_56] : memref<1024x10xf32, #tpu.memory_space<vmem>>, vector<1024x10xf32>
    %cst_57 = arith.constant dense<0.000000e+00> : vector<2x10xf32>
    %72 = tpu.matmul %70, %71, %cst_57 {dimension_numbers = #tpu.dot_dimension_numbers<[1], [0], [0], [1], [0, 0, 1, 1], [], []>} : vector<2x1024xf32>, vector<1024x10xf32>, vector<2x10xf32> -> vector<2x10xf32>
    %c0_58 = arith.constant 0 : index
    %c0_59 = arith.constant 0 : index
    %73 = vector.load %arg7[%c0_58, %c0_59] : memref<1x10xf32, #tpu.memory_space<vmem>>, vector<1x10xf32>
    %74 = vector.broadcast %73 : vector<1x10xf32> to vector<2x10xf32>
    %75 = arith.addf %72, %74 : vector<2x10xf32>
    %c0_60 = arith.constant 0 : index
    %c0_61 = arith.constant 0 : index
    %76 = vector.load %arg8[%c0_60, %c0_61] : memref<2x10xf32, #tpu.memory_space<vmem>>, vector<2x10xf32>
    tpu.vector_store %arg8[%c0_60, %c0_61], %75 {strides = array<i32>} : memref<2x10xf32, #tpu.memory_space<vmem>>, vector<2x10xf32>,
    return
  }
  func.func @transform_0(%arg0: i32) -> (i32, i32) {
    %c0_i32 = arith.constant 0 : i32
    %c0_i32_0 = arith.constant 0 : i32
    %c0_i32_1 = arith.constant 0 : i32
    return %c0_i32, %c0_i32_0 : i32, i32
  }
  func.func @transform_1(%arg0: i32) -> (i32, i32) {
    %c0_i32 = arith.constant 0 : i32
    %c0_i32_0 = arith.constant 0 : i32
    %c0_i32_1 = arith.constant 0 : i32
    return %c0_i32, %c0_i32_0 : i32, i32
  }
  func.func @transform_2(%arg0: i32) -> (i32, i32) {
    %c0_i32 = arith.constant 0 : i32
    %c0_i32_0 = arith.constant 0 : i32
    %c0_i32_1 = arith.constant 0 : i32
    return %c0_i32, %c0_i32_0 : i32, i32
  }
  func.func @transform_3(%arg0: i32) -> (i32, i32) {
    %c0_i32 = arith.constant 0 : i32
    %c0_i32_0 = arith.constant 0 : i32
    %c0_i32_1 = arith.constant 0 : i32
    return %c0_i32, %c0_i32_0 : i32, i32
  }
  func.func @transform_4(%arg0: i32) -> (i32, i32) {
    %c0_i32 = arith.constant 0 : i32
    %c0_i32_0 = arith.constant 0 : i32
    %c0_i32_1 = arith.constant 0 : i32
    return %c0_i32, %c0_i32_0 : i32, i32
  }
  func.func @transform_5(%arg0: i32) -> (i32, i32) {
    %c0_i32 = arith.constant 0 : i32
    %c0_i32_0 = arith.constant 0 : i32
    %c0_i32_1 = arith.constant 0 : i32
    return %c0_i32, %c0_i32_0 : i32, i32
  }
  func.func @transform_6(%arg0: i32) -> (i32, i32) {
    %c0_i32 = arith.constant 0 : i32
    %c0_i32_0 = arith.constant 0 : i32
    %c0_i32_1 = arith.constant 0 : i32
    return %c0_i32, %c0_i32_0 : i32, i32
  }
  func.func @transform_7(%arg0: i32) -> (i32, i32) {
    %c0_i32 = arith.constant 0 : i32
    %c0_i32_0 = arith.constant 0 : i32
    %c0_i32_1 = arith.constant 0 : i32
    return %c0_i32, %c0_i32_0 : i32, i32
  }
}

</mosaic_0001>

<llo_original>
// kernel: cnn_forward_fused.1
$region0: #{cnn_forward_fused.1}
  #allocation0 [shape = 'u32[]', space=smem, size = 0x4, offset = 0x4, fixed_abs, tag = 'smem constant byte address 0x4 - core index']
  #allocation1 [shape = 'u32[144,128]{1,0:T(1,128)}', space=vmem, size = 0x12000, scoped, tag = 'internal scratch']
  #allocation2 [shape = 'f32[16,768]{1,0:T(8,128)}', space=vmem, size = 0xc000, scoped, tag = 'scratch operand']
  #allocation3 [shape = 'f32[2,1024]{1,0:T(2,128)}', space=vmem, size = 0x2000, scoped, tag = 'scratch operand']
  %s0 = inlined_call_operand.vmem [shape: bf16[32,162], index: 0, kind: input, shape index: {}]
  %s1 = inlined_call_operand.vmem [shape: bf16[162,512], index: 1, kind: input, shape index: {}]
  %s2 = inlined_call_operand.vmem [shape: f32[1,512], index: 2, kind: input, shape index: {}]
  %s3 = inlined_call_operand.vmem [shape: bf16[768,512], index: 3, kind: input, shape index: {}]
  %s4 = inlined_call_operand.vmem [shape: f32[1,512], index: 4, kind: input, shape index: {}]
  %s5 = inlined_call_operand.vmem [shape: f32[1024,10], index: 5, kind: input, shape index: {}]
  %s6 = inlined_call_operand.vmem [shape: f32[1,10], index: 6, kind: input, shape index: {}]
  %s7 = inlined_call_operand.hbm [shape: f32[2,10], index: 7, kind: output, shape index: {}]
  %s8 = sld [smem:[#allocation0]]
  $region38: #{cnn_forward_fused.1} parent=0
    _
  %s10 = ssub.s32 1, %s8
  %s11 = scalar_select 0, %s10, %s8
  $region1: #{cnn_forward_fused.1} parent=0
    #allocation4 [shape = 'u8[1024]{0}', space=vmem, size = 0x400, scoped, tag = 'output window, operand 0, single buffered']
    #allocation5 [shape = 's32[1]{0}', space=sflag, size = 0x4, scoped, tag = 'scoped memory for cnn_forward_fused.1']
    %12 = vsyncpa [#allocation5], 0
    // Predicated region
    $region2: #{cnn_forward_fused.1} parent=1 // pred_check
      _
    $region3: #{cnn_forward_fused.1} parent=1 // pred_check_branch
      %14 = sbr.rel (0) target = $region5
    $region4: #{cnn_forward_fused.1} parent=1 // pred_region
      _
    $region5: #{cnn_forward_fused.1} parent=1 // pred_fallthru
      _
    // Predicated region
    $region6: #{cnn_forward_fused.1} parent=1 // pred_check
      _
    $region7: #{cnn_forward_fused.1} parent=1 // pred_check_branch
      %16 = sbr.rel (0) target = $region9
    $region8: #{cnn_forward_fused.1} parent=1 // pred_region
      _
    $region9: #{cnn_forward_fused.1} parent=1 // pred_fallthru
      _
    // Predicated region
    $region10: #{cnn_forward_fused.1} parent=1 // pred_check
      _
    $region11: #{cnn_forward_fused.1} parent=1 // pred_check_branch
      %18 = sbr.rel (0) target = $region13
    $region12: #{cnn_forward_fused.1} parent=1 // pred_region
      _
    $region13: #{cnn_forward_fused.1} parent=1 // pred_fallthru
      _
    // Predicated region
    $region14: #{cnn_forward_fused.1} parent=1 // pred_check
      _
    $region15: #{cnn_forward_fused.1} parent=1 // pred_check_branch
      %20 = sbr.rel (0) target = $region17
    $region16: #{cnn_forward_fused.1} parent=1 // pred_region
      _
    $region17: #{cnn_forward_fused.1} parent=1 // pred_fallthru
      _
    // Predicated region
    $region18: #{cnn_forward_fused.1} parent=1 // pred_check
      _
    $region19: #{cnn_forward_fused.1} parent=1 // pred_check_branch
      %22 = sbr.rel (0) target = $region21
    $region20: #{cnn_forward_fused.1} parent=1 // pred_region
      _
    $region21: #{cnn_forward_fused.1} parent=1 // pred_fallthru
      _
    // Predicated region
    $region22: #{cnn_forward_fused.1} parent=1 // pred_check
      _
    $region23: #{cnn_forward_fused.1} parent=1 // pred_check_branch
      %24 = sbr.rel (0) target = $region25
    $region24: #{cnn_forward_fused.1} parent=1 // pred_region
      _
    $region25: #{cnn_forward_fused.1} parent=1 // pred_fallthru
      _
    // Predicated region
    $region26: #{cnn_forward_fused.1} parent=1 // pred_check
      _
    $region27: #{cnn_forward_fused.1} parent=1 // pred_check_branch
      %26 = sbr.rel (0) target = $region29
    $region28: #{cnn_forward_fused.1} parent=1 // pred_region
      _
    $region29: #{cnn_forward_fused.1} parent=1 // pred_fallthru
      _
    %v28 = vld [vmem:[%s0] sm:$0xff]
    %v29 = vld [vmem:[%s0 + $0x8] sm:$0xff]
    %v30 = vld [vmem:[%s0 + $0x10] sm:$0xff]
    %v31 = vld [vmem:[%s0 + $0x18] sm:$0xff]
    %v32 = vld [vmem:[%s1] sm:$0xff]
    %v33 = vld [vmem:[%s1 + $0x8] sm:$0xff]
    %v34 = vld [vmem:[%s1 + $0x10] sm:$0xff]
    %v35 = vld [vmem:[%s1 + $0x18] sm:$0xff]
    %v36 = vld [vmem:[%s1 + $0x20] sm:$0xff]
    %v37 = vld [vmem:[%s1 + $0x28] sm:$0xff]
    %v38 = vld [vmem:[%s1 + $0x30] sm:$0xff]
    %v39 = vld [vmem:[%s1 + $0x38] sm:$0xff]
    %v40 = vld [vmem:[%s1 + $0x40] sm:$0xff]
    %v41 = vld [vmem:[%s1 + $0x48] sm:$0xff]
    %v42 = vld [vmem:[%s1 + $0x50] sm:$0xff]
    %v43 = vld [vmem:[%s1 + $0x58] sm:$0xff]
    %v44 = vld [vmem:[%s1 + $0x60] sm:$0xff]
    %v45 = vld [vmem:[%s1 + $0x68] sm:$0xff]
    %v46 = vld [vmem:[%s1 + $0x70] sm:$0xff]
    %v47 = vld [vmem:[%s1 + $0x78] sm:$0xff]
    %v48 = vld [vmem:[%s1 + $0x80] sm:$0xff]
    %v49 = vld [vmem:[%s1 + $0x88] sm:$0xff]
    %v50 = vld [vmem:[%s1 + $0x90] sm:$0xff]
    %v51 = vld [vmem:[%s1 + $0x98] sm:$0xff]
    %v52 = vld [vmem:[%s1 + $0xa0] sm:$0xff]
    %v53 = vld [vmem:[%s1 + $0xa8] sm:$0xff]
    %v54 = vld [vmem:[%s1 + $0xb0] sm:$0xff]
    %v55 = vld [vmem:[%s1 + $0xb8] sm:$0xff]
    %v56 = vld [vmem:[%s1 + $0xc0] sm:$0xff]
    %v57 = vld [vmem:[%s1 + $0xc8] sm:$0xff]
    %v58 = vld [vmem:[%s1 + $0xd0] sm:$0xff]
    %v59 = vld [vmem:[%s1 + $0xd8] sm:$0xff]
    %v60 = vld [vmem:[%s1 + $0xe0] sm:$0xff]
    %v61 = vld [vmem:[%s1 + $0xe8] sm:$0xff]
    %v62 = vld [vmem:[%s1 + $0xf0] sm:$0xff]
    %v63 = vld [vmem:[%s1 + $0xf8] sm:$0xff]
    %v64 = vld [vmem:[%s1 + $0x100] sm:$0xff]
    %v65 = vld [vmem:[%s1 + $0x108] sm:$0xff]
    %v66 = vld [vmem:[%s1 + $0x110] sm:$0xff]
    %v67 = vld [vmem:[%s1 + $0x118] sm:$0xff]
    %v68 = vld [vmem:[%s1 + $0x120] sm:$0xff]
    %v69 = vld [vmem:[%s1 + $0x128] sm:$0xff]
    %v70 = vld [vmem:[%s1 + $0x130] sm:$0xff]
    %v71 = vld [vmem:[%s1 + $0x138] sm:$0xff]
    %v72 = vld [vmem:[%s1 + $0x140] sm:$0x11]
    %v73 = vld [vmem:[%s1 + $0x148] sm:$0x11]
    %v74 = vld [vmem:[%s2] sm:$0xf]
    %v76 = vlaneseq
    %v77 = vshrl.u32 %v76, 7
    %v78 = vsub.s32 0, %v77
    %v79 = vrot.slane %v74, %v78
    %v80 = vlaneseq
    %v81 = vshrl.u32 %v80, 7
    %v82 = vsub.s32 1, %v81
    %v83 = vrot.slane %v74, %v82
    %v84 = vlaneseq
    %v85 = vshrl.u32 %v84, 7
    %v86 = vsub.s32 2, %v85
    %v87 = vrot.slane %v74, %v86
    %v88 = vlaneseq
    %v89 = vshrl.u32 %v88, 7
    %v90 = vsub.s32 3, %v89
    %v91 = vrot.slane %v74, %v90
    %v100 = vunpack.c.l.b16 %v28
    %v101 = vunpack.c.h.b16 %v28
    %v102 = vunpack.c.l.b16 %v29
    %v103 = vunpack.c.h.b16 %v29
    %v104 = vunpack.c.l.b16 %v30
    %v105 = vunpack.c.h.b16 %v30
    %v106 = vunpack.c.l.b16 %v31
    %v107 = vunpack.c.h.b16 %v31
    %v108 = vpack.c.b16 %v102, %v100
    %v109 = vpack.c.b16 %v103, %v101
    %v110 = vpack.c.b16 %v106, %v104
    %v111 = vpack.c.b16 %v107, %v105
    %v156 = vunpack.c.l.b16 %v32
    %v157 = vunpack.c.h.b16 %v32
    %v158 = vunpack.c.l.b16 %v33
    %v159 = vunpack.c.h.b16 %v33
    %v160 = vunpack.c.l.b16 %v34
    %v161 = vunpack.c.h.b16 %v34
    %v162 = vunpack.c.l.b16 %v35
    %v163 = vunpack.c.h.b16 %v35
    %v164 = vunpack.c.l.b16 %v36
    %v165 = vunpack.c.h.b16 %v36
    %v166 = vunpack.c.l.b16 %v37
    %v167 = vunpack.c.h.b16 %v37
    %v168 = vunpack.c.l.b16 %v38
    %v169 = vunpack.c.h.b16 %v38
    %v170 = vunpack.c.l.b16 %v39
    %v171 = vunpack.c.h.b16 %v39
    %v172 = vunpack.c.l.b16 %v40
    %v173 = vunpack.c.h.b16 %v40
    %v174 = vunpack.c.l.b16 %v41
    %v175 = vunpack.c.h.b16 %v41
    %v176 = vunpack.c.l.b16 %v42
    %v177 = vunpack.c.h.b16 %v42
    %v178 = vunpack.c.l.b16 %v43
    %v179 = vunpack.c.h.b16 %v43
    %v180 = vunpack.c.l.b16 %v44
    %v181 = vunpack.c.h.b16 %v44
    %v182 = vunpack.c.l.b16 %v45
    %v183 = vunpack.c.h.b16 %v45
    %v184 = vunpack.c.l.b16 %v46
    %v185 = vunpack.c.h.b16 %v46
    %v186 = vunpack.c.l.b16 %v47
    %v187 = vunpack.c.h.b16 %v47
    %v188 = vunpack.c.l.b16 %v48
    %v189 = vunpack.c.h.b16 %v48
    %v190 = vunpack.c.l.b16 %v49
    %v191 = vunpack.c.h.b16 %v49
    %v192 = vunpack.c.l.b16 %v50
    %v193 = vunpack.c.h.b16 %v50
    %v194 = vunpack.c.l.b16 %v51
    %v195 = vunpack.c.h.b16 %v51
    %v196 = vunpack.c.l.b16 %v52
    %v197 = vunpack.c.h.b16 %v52
    %v198 = vunpack.c.l.b16 %v53
    %v199 = vunpack.c.h.b16 %v53
    %v200 = vunpack.c.l.b16 %v54
    %v201 = vunpack.c.h.b16 %v54
    %v202 = vunpack.c.l.b16 %v55
    %v203 = vunpack.c.h.b16 %v55
    %v204 = vunpack.c.l.b16 %v56
    %v205 = vunpack.c.h.b16 %v56
    %v206 = vunpack.c.l.b16 %v57
    %v207 = vunpack.c.h.b16 %v57
    %v208 = vunpack.c.l.b16 %v58
    %v209 = vunpack.c.h.b16 %v58
    %v210 = vunpack.c.l.b16 %v59
    %v211 = vunpack.c.h.b16 %v59
    %v212 = vunpack.c.l.b16 %v60
    %v213 = vunpack.c.h.b16 %v60
    %v214 = vunpack.c.l.b16 %v61
    %v215 = vunpack.c.h.b16 %v61
    %v216 = vunpack.c.l.b16 %v62
    %v217 = vunpack.c.h.b16 %v62
    %v218 = vunpack.c.l.b16 %v63
    %v219 = vunpack.c.h.b16 %v63
    %v220 = vunpack.c.l.b16 %v64
    %v221 = vunpack.c.h.b16 %v64
    %v222 = vunpack.c.l.b16 %v65
    %v223 = vunpack.c.h.b16 %v65
    %v224 = vunpack.c.l.b16 %v66
    %v225 = vunpack.c.h.b16 %v66
    %v226 = vunpack.c.l.b16 %v67
    %v227 = vunpack.c.h.b16 %v67
    %v228 = vunpack.c.l.b16 %v68
    %v229 = vunpack.c.h.b16 %v68
    %v230 = vunpack.c.l.b16 %v69
    %v231 = vunpack.c.h.b16 %v69
    %v232 = vunpack.c.l.b16 %v70
    %v233 = vunpack.c.h.b16 %v70
    %v234 = vunpack.c.l.b16 %v71
    %v235 = vunpack.c.h.b16 %v71
    %v236 = vunpack.c.l.b16 %v72
    %v237 = vunpack.c.h.b16 %v72
    %v238 = vunpack.c.l.b16 %v73
    %v239 = vunpack.c.h.b16 %v73
    %v240 = vpack.c.b16 %v160, %v156
    %v241 = vpack.c.b16 %v161, %v157
    %v242 = vpack.c.b16 %v162, %v158
    %v243 = vpack.c.b16 %v163, %v159
    %v244 = vpack.c.b16 %v168, %v164
    %v245 = vpack.c.b16 %v169, %v165
    %v246 = vpack.c.b16 %v170, %v166
    %v247 = vpack.c.b16 %v171, %v167
    %v248 = vpack.c.b16 %v176, %v172
    %v249 = vpack.c.b16 %v177, %v173
    %v250 = vpack.c.b16 %v178, %v174
    %v251 = vpack.c.b16 %v179, %v175
    %v252 = vpack.c.b16 %v184, %v180
    %v253 = vpack.c.b16 %v185, %v181
    %v254 = vpack.c.b16 %v186, %v182
    %v255 = vpack.c.b16 %v187, %v183
    %v256 = vpack.c.b16 %v192, %v188
    %v257 = vpack.c.b16 %v193, %v189
    %v258 = vpack.c.b16 %v194, %v190
    %v259 = vpack.c.b16 %v195, %v191
    %v260 = vpack.c.b16 %v200, %v196
    %v261 = vpack.c.b16 %v201, %v197
    %v262 = vpack.c.b16 %v202, %v198
    %v263 = vpack.c.b16 %v203, %v199
    %v264 = vpack.c.b16 %v208, %v204
    %v265 = vpack.c.b16 %v209, %v205
    %v266 = vpack.c.b16 %v210, %v206
    %v267 = vpack.c.b16 %v211, %v207
    %v268 = vpack.c.b16 %v216, %v212
    %v269 = vpack.c.b16 %v217, %v213
    %v270 = vpack.c.b16 %v218, %v214
    %v271 = vpack.c.b16 %v219, %v215
    %v272 = vpack.c.b16 %v224, %v220
    %v273 = vpack.c.b16 %v225, %v221
    %v274 = vpack.c.b16 %v226, %v222
    %v275 = vpack.c.b16 %v227, %v223
    %v276 = vpack.c.b16 %v232, %v228
    %v277 = vpack.c.b16 %v233, %v229
    %v278 = vpack.c.b16 %v234, %v230
    %v279 = vpack.c.b16 %v235, %v231
    %v280 = vpack.c.b16 %v236, %v236
    %v281 = vpack.c.b16 %v237, %v237
    %v282 = vpack.c.b16 %v238, %v238
    %v283 = vpack.c.b16 %v239, %v239
    %vm324 = vcmask 277504
    %v326 = vsel %vm324, %v109, 0
    %v329 = vsel %vm324, %v111, 0
    %vm331 = vcmask 1040384
    %v333 = vsel %vm331, %v280, 0
    %v336 = vsel %vm331, %v281, 0
    %v339 = vsel %vm331, %v282, 0
    %v342 = vsel %vm331, %v283, 0
    %344 = vmatprep.subr.bf16.mxu0 %v241
    %345 = vmatpush1.bf16.msra.mxu0 %v240
    %346 = vmatprep.subr.bf16.mxu0 %v245
    %347 = vmatpush1.bf16.msra.mxu0 %v244
    %348 = vmatprep.subr.bf16.mxu0 %v249
    %349 = vmatpush1.bf16.msra.mxu0 %v248
    %350 = vmatprep.subr.bf16.mxu0 %v253
    %351 = vmatpush1.bf16.msra.mxu0 %v252
    %352 = vmatprep.subr.bf16.mxu0 %v257
    %353 = vmatpush1.bf16.msra.mxu0 %v256
    %354 = vmatprep.subr.bf16.mxu0 %v261
    %355 = vmatpush1.bf16.msra.mxu0 %v260
    %356 = vmatprep.subr.bf16.mxu0 %v265
    %357 = vmatpush1.bf16.msra.mxu0 %v264
    %358 = vmatprep.subr.bf16.mxu0 %v269
    %359 = vmatpush1.bf16.msra.mxu0 %v268
    %360 = vmatprep.subr.bf16.mxu0 %v273
    %361 = vmatpush1.bf16.msra.mxu0 %v272
    %362 = vmatprep.subr.bf16.mxu0 %v277
    %363 = vmatpush1.bf16.msra.mxu0 %v276
    %364 = vmatprep.subr.bf16.mxu0 %v336
    %365 = vmatpush1.bf16.msra.mxu0 %v333
    %366 = vmatprep.subr.bf16.mxu0 0
    %367 = vmatpush1.bf16.msra.mxu0 0
    %368 = vmatprep.subr.bf16.mxu0 0
    %369 = vmatpush1.bf16.msra.mxu0 0
    %370 = vmatprep.subr.bf16.mxu0 0
    %371 = vmatpush1.bf16.msra.mxu0 0
    %372 = vmatprep.subr.bf16.mxu0 0
    %373 = vmatpush1.bf16.msra.mxu0 0
    %374 = vmatprep.subr.bf16.mxu0 0
    %375 = vmatpush1.bf16.msra.mxu0 0
    %376 = vmatprep.mubr.bf16.mxu0 %v326
    %377 = vmatmul.mubr.bf16.gmra.mrb[0].mxu0 %v108
    %v378 = vpop.f32.mrb[0].mxu0
    %v379 = vadd.f32 %v79, %v378
    %v380 = vpop.f32.mrb[0].mxu0
    %v381 = vadd.f32 %v83, %v380
    %v382 = vpop.f32.mrb[0].mxu0
    %v383 = vadd.f32 %v79, %v382
    %v384 = vpop.f32.mrb[0].mxu0
    %v385 = vadd.f32 %v83, %v384
    %386 = vmatprep.mubr.bf16.mxu0 %v329
    %387 = vmatmul.mubr.bf16.gmra.mrb[0].mxu0 %v110
    %v388 = vpop.f32.mrb[0].mxu0
    %v389 = vadd.f32 %v79, %v388
    %v390 = vpop.f32.mrb[0].mxu0
    %v391 = vadd.f32 %v83, %v390
    %v392 = vpop.f32.mrb[0].mxu0
    %v393 = vadd.f32 %v79, %v392
    %v394 = vpop.f32.mrb[0].mxu0
    %v395 = vadd.f32 %v83, %v394
    %396 = vdwg.mxu0
    %397 = vmatprep.subr.bf16.mxu0 %v243
    %398 = vmatpush1.bf16.msra.mxu0 %v242
    %399 = vmatprep.subr.bf16.mxu0 %v247
    %400 = vmatpush1.bf16.msra.mxu0 %v246
    %401 = vmatprep.subr.bf16.mxu0 %v251
    %402 = vmatpush1.bf16.msra.mxu0 %v250
    %403 = vmatprep.subr.bf16.mxu0 %v255
    %404 = vmatpush1.bf16.msra.mxu0 %v254
    %405 = vmatprep.subr.bf16.mxu0 %v259
    %406 = vmatpush1.bf16.msra.mxu0 %v258
    %407 = vmatprep.subr.bf16.mxu0 %v263
    %408 = vmatpush1.bf16.msra.mxu0 %v262
    %409 = vmatprep.subr.bf16.mxu0 %v267
    %410 = vmatpush1.bf16.msra.mxu0 %v266
    %411 = vmatprep.subr.bf16.mxu0 %v271
    %412 = vmatpush1.bf16.msra.mxu0 %v270
    %413 = vmatprep.subr.bf16.mxu0 %v275
    %414 = vmatpush1.bf16.msra.mxu0 %v274
    %415 = vmatprep.subr.bf16.mxu0 %v279
    %416 = vmatpush1.bf16.msra.mxu0 %v278
    %417 = vmatprep.subr.bf16.mxu0 %v342
    %418 = vmatpush1.bf16.msra.mxu0 %v339
    %419 = vmatprep.subr.bf16.mxu0 0
    %420 = vmatpush1.bf16.msra.mxu0 0
    %421 = vmatprep.subr.bf16.mxu0 0
    %422 = vmatpush1.bf16.msra.mxu0 0
    %423 = vmatprep.subr.bf16.mxu0 0
    %424 = vmatpush1.bf16.msra.mxu0 0
    %425 = vmatprep.subr.bf16.mxu0 0
    %426 = vmatpush1.bf16.msra.mxu0 0
    %427 = vmatprep.subr.bf16.mxu0 0
    %428 = vmatpush1.bf16.msra.mxu0 0
    %429 = vmatprep.mubr.bf16.mxu0 %v326
    %430 = vmatmul.mubr.bf16.gmra.mrb[0].mxu0 %v108
    %v431 = vpop.f32.mrb[0].mxu0
    %v432 = vadd.f32 %v87, %v431
    %v433 = vpop.f32.mrb[0].mxu0
    %v434 = vadd.f32 %v91, %v433
    %v435 = vpop.f32.mrb[0].mxu0
    %v436 = vadd.f32 %v87, %v435
    %v437 = vpop.f32.mrb[0].mxu0
    %v438 = vadd.f32 %v91, %v437
    %439 = vmatprep.mubr.bf16.mxu0 %v329
    %440 = vmatmul.mubr.bf16.gmra.mrb[0].mxu0 %v110
    %v441 = vpop.f32.mrb[0].mxu0
    %v442 = vadd.f32 %v87, %v441
    %v443 = vpop.f32.mrb[0].mxu0
    %v444 = vadd.f32 %v91, %v443
    %v445 = vpop.f32.mrb[0].mxu0
    %v446 = vadd.f32 %v87, %v445
    %v447 = vpop.f32.mrb[0].mxu0
    %v448 = vadd.f32 %v91, %v447
    %449 = vdwg.mxu0
    %v450 = vmax.f32 %v379, 0.0
    %v451 = vmax.f32 %v381, 0.0
    %v452 = vmax.f32 %v432, 0.0
    %v453 = vmax.f32 %v434, 0.0
    %v454 = vmax.f32 %v383, 0.0
    %v455 = vmax.f32 %v385, 0.0
    %v456 = vmax.f32 %v436, 0.0
    %v457 = vmax.f32 %v438, 0.0
    %v458 = vmax.f32 %v389, 0.0
    %v459 = vmax.f32 %v391, 0.0
    %v460 = vmax.f32 %v442, 0.0
    %v461 = vmax.f32 %v444, 0.0
    %v462 = vmax.f32 %v393, 0.0
    %v463 = vmax.f32 %v395, 0.0
    %v464 = vmax.f32 %v446, 0.0
    %v465 = vmax.f32 %v448, 0.0
    %v466 = vmax.f32 %v450, %v458
    %v467 = vmax.f32 %v451, %v459
    %v468 = vmax.f32 %v452, %v460
    %v469 = vmax.f32 %v453, %v461
    %v470 = vmax.f32 %v454, %v462
    %v471 = vmax.f32 %v455, %v463
    %v472 = vmax.f32 %v456, %v464
    %v473 = vmax.f32 %v457, %v465
    %v474 = vmax.f32 %v466, %v468
    %v475 = vmax.f32 %v467, %v469
    %v476 = vmax.f32 %v470, %v472
    %v477 = vmax.f32 %v471, %v473
    %v478 = vlaneseq
    %vm479 = vcmp.ge.s32.totalorder %v478, 0
    %vm480 = vcmp.lt.s32.totalorder %v478, 256
    %vm481 = vmand %vm479, %vm480
    %482 = vst.msk [vmem:[#allocation2] ss:$8 sm:$0x3] %vm481, 0.0
    %483 = vst.msk [vmem:[#allocation2] ss:$8 sm:$0x0] %vm481, 0.0
    %v486 = vrot.slane %v474, 3
    %v487 = vrot.slane %v475, 3
    %490 = vst [vmem:[#allocation2] sm:$0xe] %v486
    %491 = vst [vmem:[#allocation2 + $0x8] sm:$0xe] %v487
    %492 = vst [vmem:[#allocation2 + $0x10] sm:$0xf] %v474
    %493 = vst [vmem:[#allocation2 + $0x18] sm:$0xf] %v475
    %v494 = vrot.slane %v474, 4
    %v495 = vrot.slane %v475, 4
    %498 = vst [vmem:[#allocation2 + $0x20] sm:$0xf] %v494
    %499 = vst [vmem:[#allocation2 + $0x28] sm:$0xf] %v495
    %500 = vst [vmem:[#allocation2 + $0x30] sm:$0xf] %v474
    %501 = vst [vmem:[#allocation2 + $0x38] sm:$0xf] %v475
    %502 = vst [vmem:[#allocation2 + $0x40] sm:$0xf] %v494
    %503 = vst [vmem:[#allocation2 + $0x48] sm:$0xf] %v495
    %v504 = vrot.slane %v474, 1
    %v505 = vrot.slane %v475, 1
    %508 = vst [vmem:[#allocation2 + $0x50] sm:$0x7] %v504
    %509 = vst [vmem:[#allocation2 + $0x58] sm:$0x7] %v505
    %s510 = scalar_lea.vmem [#allocation2], 83
    %511 = vst.msk [vmem:[%s510] ss:$8 sm:$0x3] %vm481, 0.0
    %512 = vst.msk [vmem:[%s510] ss:$8 sm:$0x0] %vm481, 0.0
    %s513 = scalar_lea.vmem [#allocation2], 4
    %514 = vst.msk [vmem:[%s513] ss:$8 sm:$0x3] %vm481, 0.0
    %515 = vst.msk [vmem:[%s513] ss:$8 sm:$0x0] %vm481, 0.0
    %v518 = vrot.slane %v476, 7
    %v519 = vrot.slane %v477, 7
    %522 = vst [vmem:[#allocation2] sm:$0xe0] %v518
    %523 = vst [vmem:[#allocation2 + $0x8] sm:$0xe0] %v519
    %v524 = vrot.slane %v476, 4
    %v525 = vrot.slane %v477, 4
    %528 = vst [vmem:[#allocation2 + $0x10] sm:$0xf0] %v524
    %529 = vst [vmem:[#allocation2 + $0x18] sm:$0xf0] %v525
    %530 = vst [vmem:[#allocation2 + $0x20] sm:$0xf0] %v476
    %531 = vst [vmem:[#allocation2 + $0x28] sm:$0xf0] %v477
    %532 = vst [vmem:[#allocation2 + $0x30] sm:$0xf0] %v524
    %533 = vst [vmem:[#allocation2 + $0x38] sm:$0xf0] %v525
    %534 = vst [vmem:[#allocation2 + $0x40] sm:$0xf0] %v476
    %535 = vst [vmem:[#allocation2 + $0x48] sm:$0xf0] %v477
    %v536 = vrot.slane %v476, 5
    %v537 = vrot.slane %v477, 5
    %540 = vst [vmem:[#allocation2 + $0x50] sm:$0x70] %v536
    %541 = vst [vmem:[#allocation2 + $0x58] sm:$0x70] %v537
    %s542 = scalar_lea.vmem [#allocation2], 87
    %543 = vst.msk [vmem:[%s542] ss:$8 sm:$0x3] %vm481, 0.0
    %544 = vst.msk [vmem:[%s542] ss:$8 sm:$0x0] %vm481, 0.0
    %v545 = vld [vmem:[#allocation2] sm:$0xff]
    %v546 = vld [vmem:[#allocation2 + $0x8] sm:$0xff]
    %v547 = vld [vmem:[#allocation2 + $0x10] sm:$0xff]
    %v548 = vld [vmem:[#allocation2 + $0x18] sm:$0xff]
    %v549 = vld [vmem:[#allocation2 + $0x20] sm:$0xff]
    %v550 = vld [vmem:[#allocation2 + $0x28] sm:$0xff]
    %v551 = vld [vmem:[#allocation2 + $0x30] sm:$0xff]
    %v552 = vld [vmem:[#allocation2 + $0x38] sm:$0xff]
    %v553 = vld [vmem:[#allocation2 + $0x40] sm:$0xff]
    %v554 = vld [vmem:[#allocation2 + $0x48] sm:$0xff]
    %v555 = vld [vmem:[#allocation2 + $0x50] sm:$0xff]
    %v556 = vld [vmem:[#allocation2 + $0x58] sm:$0xff]
    %v557 = vpack.c.bf16 %v551, %v545
    %v558 = vpack.c.bf16 %v552, %v546
    %v559 = vpack.c.bf16 %v553, %v547
    %v560 = vpack.c.bf16 %v554, %v548
    %v561 = vpack.c.bf16 %v555, %v549
    %v562 = vpack.c.bf16 %v556, %v550
    %v563 = vld [vmem:[%s3] sm:$0xff]
    %v564 = vld [vmem:[%s3 + $0x8] sm:$0xff]
    %v565 = vld [vmem:[%s3 + $0x10] sm:$0xff]
    %v566 = vld [vmem:[%s3 + $0x18] sm:$0xff]
    %v567 = vld [vmem:[%s3 + $0x20] sm:$0xff]
    %v568 = vld [vmem:[%s3 + $0x28] sm:$0xff]
    %v569 = vld [vmem:[%s3 + $0x30] sm:$0xff]
    %v570 = vld [vmem:[%s3 + $0x38] sm:$0xff]
    %v571 = vld [vmem:[%s3 + $0x40] sm:$0xff]
    %v572 = vld [vmem:[%s3 + $0x48] sm:$0xff]
    %v573 = vld [vmem:[%s3 + $0x50] sm:$0xff]
    %v574 = vld [vmem:[%s3 + $0x58] sm:$0xff]
    %v575 = vld [vmem:[%s3 + $0x60] sm:$0xff]
    %v576 = vld [vmem:[%s3 + $0x68] sm:$0xff]
    %v577 = vld [vmem:[%s3 + $0x70] sm:$0xff]
    %v578 = vld [vmem:[%s3 + $0x78] sm:$0xff]
    %v579 = vld [vmem:[%s3 + $0x80] sm:$0xff]
    %v580 = vld [vmem:[%s3 + $0x88] sm:$0xff]
    %v581 = vld [vmem:[%s3 + $0x90] sm:$0xff]
    %v582 = vld [vmem:[%s3 + $0x98] sm:$0xff]
    %v583 = vld [vmem:[%s3 + $0xa0] sm:$0xff]
    %v584 = vld [vmem:[%s3 + $0xa8] sm:$0xff]
    %v585 = vld [vmem:[%s3 + $0xb0] sm:$0xff]
    %v586 = vld [vmem:[%s3 + $0xb8] sm:$0xff]
    %v587 = vld [vmem:[%s3 + $0xc0] sm:$0xff]
    %v588 = vld [vmem:[%s3 + $0xc8] sm:$0xff]
    %v589 = vld [vmem:[%s3 + $0xd0] sm:$0xff]
    %v590 = vld [vmem:[%s3 + $0xd8] sm:$0xff]
    %v591 = vld [vmem:[%s3 + $0xe0] sm:$0xff]
    %v592 = vld [vmem:[%s3 + $0xe8] sm:$0xff]
    %v593 = vld [vmem:[%s3 + $0xf0] sm:$0xff]
    %v594 = vld [vmem:[%s3 + $0xf8] sm:$0xff]
    %v595 = vld [vmem:[%s3 + $0x100] sm:$0xff]
    %v596 = vld [vmem:[%s3 + $0x108] sm:$0xff]
    %v597 = vld [vmem:[%s3 + $0x110] sm:$0xff]
    %v598 = vld [vmem:[%s3 + $0x118] sm:$0xff]
    %v599 = vld [vmem:[%s3 + $0x120] sm:$0xff]
    %v600 = vld [vmem:[%s3 + $0x128] sm:$0xff]
    %v601 = vld [vmem:[%s3 + $0x130] sm:$0xff]
    %v602 = vld [vmem:[%s3 + $0x138] sm:$0xff]
    %v603 = vld [vmem:[%s3 + $0x140] sm:$0xff]
    %v604 = vld [vmem:[%s3 + $0x148] sm:$0xff]
    %v605 = vld [vmem:[%s3 + $0x150] sm:$0xff]
    %v606 = vld [vmem:[%s3 + $0x158] sm:$0xff]
    %v607 = vld [vmem:[%s3 + $0x160] sm:$0xff]
    %v608 = vld [vmem:[%s3 + $0x168] sm:$0xff]
    %v609 = vld [vmem:[%s3 + $0x170] sm:$0xff]
    %v610 = vld [vmem:[%s3 + $0x178] sm:$0xff]
    %v611 = vld [vmem:[%s3 + $0x180] sm:$0xff]
    %v612 = vld [vmem:[%s3 + $0x188] sm:$0xff]
    %v613 = vld [vmem:[%s3 + $0x190] sm:$0xff]
    %v614 = vld [vmem:[%s3 + $0x198] sm:$0xff]
    %v615 = vld [vmem:[%s3 + $0x1a0] sm:$0xff]
    %v616 = vld [vmem:[%s3 + $0x1a8] sm:$0xff]
    %v617 = vld [vmem:[%s3 + $0x1b0] sm:$0xff]
    %v618 = vld [vmem:[%s3 + $0x1b8] sm:$0xff]
    %v619 = vld [vmem:[%s3 + $0x1c0] sm:$0xff]
    %v620 = vld [vmem:[%s3 + $0x1c8] sm:$0xff]
    %v621 = vld [vmem:[%s3 + $0x1d0] sm:$0xff]
    %v622 = vld [vmem:[%s3 + $0x1d8] sm:$0xff]
    %v623 = vld [vmem:[%s3 + $0x1e0] sm:$0xff]
    %v624 = vld [vmem:[%s3 + $0x1e8] sm:$0xff]
    %v625 = vld [vmem:[%s3 + $0x1f0] sm:$0xff]
    %v626 = vld [vmem:[%s3 + $0x1f8] sm:$0xff]
    %v627 = vld [vmem:[%s3 + $0x200] sm:$0xff]
    %v628 = vld [vmem:[%s3 + $0x208] sm:$0xff]
    %v629 = vld [vmem:[%s3 + $0x210] sm:$0xff]
    %v630 = vld [vmem:[%s3 + $0x218] sm:$0xff]
    %v631 = vld [vmem:[%s3 + $0x220] sm:$0xff]
    %v632 = vld [vmem:[%s3 + $0x228] sm:$0xff]
    %v633 = vld [vmem:[%s3 + $0x230] sm:$0xff]
    %v634 = vld [vmem:[%s3 + $0x238] sm:$0xff]
    %v635 = vld [vmem:[%s3 + $0x240] sm:$0xff]
    %v636 = vld [vmem:[%s3 + $0x248] sm:$0xff]
    %v637 = vld [vmem:[%s3 + $0x250] sm:$0xff]
    %v638 = vld [vmem:[%s3 + $0x258] sm:$0xff]
    %v639 = vld [vmem:[%s3 + $0x260] sm:$0xff]
    %v640 = vld [vmem:[%s3 + $0x268] sm:$0xff]
    %v641 = vld [vmem:[%s3 + $0x270] sm:$0xff]
    %v642 = vld [vmem:[%s3 + $0x278] sm:$0xff]
    %v643 = vld [vmem:[%s3 + $0x280] sm:$0xff]
    %v644 = vld [vmem:[%s3 + $0x288] sm:$0xff]
    %v645 = vld [vmem:[%s3 + $0x290] sm:$0xff]
    %v646 = vld [vmem:[%s3 + $0x298] sm:$0xff]
    %v647 = vld [vmem:[%s3 + $0x2a0] sm:$0xff]
    %v648 = vld [vmem:[%s3 + $0x2a8] sm:$0xff]
    %v649 = vld [vmem:[%s3 + $0x2b0] sm:$0xff]
    %v650 = vld [vmem:[%s3 + $0x2b8] sm:$0xff]
    %v651 = vld [vmem:[%s3 + $0x2c0] sm:$0xff]
    %v652 = vld [vmem:[%s3 + $0x2c8] sm:$0xff]
    %v653 = vld [vmem:[%s3 + $0x2d0] sm:$0xff]
    %v654 = vld [vmem:[%s3 + $0x2d8] sm:$0xff]
    %v655 = vld [vmem:[%s3 + $0x2e0] sm:$0xff]
    %v656 = vld [vmem:[%s3 + $0x2e8] sm:$0xff]
    %v657 = vld [vmem:[%s3 + $0x2f0] sm:$0xff]
    %v658 = vld [vmem:[%s3 + $0x2f8] sm:$0xff]
    %v659 = vld [vmem:[%s3 + $0x300] sm:$0xff]
    %v660 = vld [vmem:[%s3 + $0x308] sm:$0xff]
    %v661 = vld [vmem:[%s3 + $0x310] sm:$0xff]
    %v662 = vld [vmem:[%s3 + $0x318] sm:$0xff]
    %v663 = vld [vmem:[%s3 + $0x320] sm:$0xff]
    %v664 = vld [vmem:[%s3 + $0x328] sm:$0xff]
    %v665 = vld [vmem:[%s3 + $0x330] sm:$0xff]
    %v666 = vld [vmem:[%s3 + $0x338] sm:$0xff]
    %v667 = vld [vmem:[%s3 + $0x340] sm:$0xff]
    %v668 = vld [vmem:[%s3 + $0x348] sm:$0xff]
    %v669 = vld [vmem:[%s3 + $0x350] sm:$0xff]
    %v670 = vld [vmem:[%s3 + $0x358] sm:$0xff]
    %v671 = vld [vmem:[%s3 + $0x360] sm:$0xff]
    %v672 = vld [vmem:[%s3 + $0x368] sm:$0xff]
    %v673 = vld [vmem:[%s3 + $0x370] sm:$0xff]
    %v674 = vld [vmem:[%s3 + $0x378] sm:$0xff]
    %v675 = vld [vmem:[%s3 + $0x380] sm:$0xff]
    %v676 = vld [vmem:[%s3 + $0x388] sm:$0xff]
    %v677 = vld [vmem:[%s3 + $0x390] sm:$0xff]
    %v678 = vld [vmem:[%s3 + $0x398] sm:$0xff]
    %v679 = vld [vmem:[%s3 + $0x3a0] sm:$0xff]
    %v680 = vld [vmem:[%s3 + $0x3a8] sm:$0xff]
    %v681 = vld [vmem:[%s3 + $0x3b0] sm:$0xff]
    %v682 = vld [vmem:[%s3 + $0x3b8] sm:$0xff]
    %v683 = vld [vmem:[%s3 + $0x3c0] sm:$0xff]
    %v684 = vld [vmem:[%s3 + $0x3c8] sm:$0xff]
    %v685 = vld [vmem:[%s3 + $0x3d0] sm:$0xff]
    %v686 = vld [vmem:[%s3 + $0x3d8] sm:$0xff]
    %v687 = vld [vmem:[%s3 + $0x3e0] sm:$0xff]
    %v688 = vld [vmem:[%s3 + $0x3e8] sm:$0xff]
    %v689 = vld [vmem:[%s3 + $0x3f0] sm:$0xff]
    %v690 = vld [vmem:[%s3 + $0x3f8] sm:$0xff]
    %v691 = vld [vmem:[%s3 + $0x400] sm:$0xff]
    %v692 = vld [vmem:[%s3 + $0x408] sm:$0xff]
    %v693 = vld [vmem:[%s3 + $0x410] sm:$0xff]
    %v694 = vld [vmem:[%s3 + $0x418] sm:$0xff]
    %v695 = vld [vmem:[%s3 + $0x420] sm:$0xff]
    %v696 = vld [vmem:[%s3 + $0x428] sm:$0xff]
    %v697 = vld [vmem:[%s3 + $0x430] sm:$0xff]
    %v698 = vld [vmem:[%s3 + $0x438] sm:$0xff]
    %v699 = vld [vmem:[%s3 + $0x440] sm:$0xff]
    %v700 = vld [vmem:[%s3 + $0x448] sm:$0xff]
    %v701 = vld [vmem:[%s3 + $0x450] sm:$0xff]
    %v702 = vld [vmem:[%s3 + $0x458] sm:$0xff]
    %v703 = vld [vmem:[%s3 + $0x460] sm:$0xff]
    %v704 = vld [vmem:[%s3 + $0x468] sm:$0xff]
    %v705 = vld [vmem:[%s3 + $0x470] sm:$0xff]
    %v706 = vld [vmem:[%s3 + $0x478] sm:$0xff]
    %v707 = vld [vmem:[%s3 + $0x480] sm:$0xff]
    %v708 = vld [vmem:[%s3 + $0x488] sm:$0xff]
    %v709 = vld [vmem:[%s3 + $0x490] sm:$0xff]
    %v710 = vld [vmem:[%s3 + $0x498] sm:$0xff]
    %v711 = vld [vmem:[%s3 + $0x4a0] sm:$0xff]
    %v712 = vld [vmem:[%s3 + $0x4a8] sm:$0xff]
    %v713 = vld [vmem:[%s3 + $0x4b0] sm:$0xff]
    %v714 = vld [vmem:[%s3 + $0x4b8] sm:$0xff]
    %v715 = vld [vmem:[%s3 + $0x4c0] sm:$0xff]
    %v716 = vld [vmem:[%s3 + $0x4c8] sm:$0xff]
    %v717 = vld [vmem:[%s3 + $0x4d0] sm:$0xff]
    %v718 = vld [vmem:[%s3 + $0x4d8] sm:$0xff]
    %v719 = vld [vmem:[%s3 + $0x4e0] sm:$0xff]
    %v720 = vld [vmem:[%s3 + $0x4e8] sm:$0xff]
    %v721 = vld [vmem:[%s3 + $0x4f0] sm:$0xff]
    %v722 = vld [vmem:[%s3 + $0x4f8] sm:$0xff]
    %v723 = vld [vmem:[%s3 + $0x500] sm:$0xff]
    %v724 = vld [vmem:[%s3 + $0x508] sm:$0xff]
    %v725 = vld [vmem:[%s3 + $0x510] sm:$0xff]
    %v726 = vld [vmem:[%s3 + $0x518] sm:$0xff]
    %v727 = vld [vmem:[%s3 + $0x520] sm:$0xff]
    %v728 = vld [vmem:[%s3 + $0x528] sm:$0xff]
    %v729 = vld [vmem:[%s3 + $0x530] sm:$0xff]
    %v730 = vld [vmem:[%s3 + $0x538] sm:$0xff]
    %v731 = vld [vmem:[%s3 + $0x540] sm:$0xff]
    %v732 = vld [vmem:[%s3 + $0x548] sm:$0xff]
    %v733 = vld [vmem:[%s3 + $0x550] sm:$0xff]
    %v734 = vld [vmem:[%s3 + $0x558] sm:$0xff]
    %v735 = vld [vmem:[%s3 + $0x560] sm:$0xff]
    %v736 = vld [vmem:[%s3 + $0x568] sm:$0xff]
    %v737 = vld [vmem:[%s3 + $0x570] sm:$0xff]
    %v738 = vld [vmem:[%s3 + $0x578] sm:$0xff]
    %v739 = vld [vmem:[%s3 + $0x580] sm:$0xff]
    %v740 = vld [vmem:[%s3 + $0x588] sm:$0xff]
    %v741 = vld [vmem:[%s3 + $0x590] sm:$0xff]
    %v742 = vld [vmem:[%s3 + $0x598] sm:$0xff]
    %v743 = vld [vmem:[%s3 + $0x5a0] sm:$0xff]
    %v744 = vld [vmem:[%s3 + $0x5a8] sm:$0xff]
    %v745 = vld [vmem:[%s3 + $0x5b0] sm:$0xff]
    %v746 = vld [vmem:[%s3 + $0x5b8] sm:$0xff]
    %v747 = vld [vmem:[%s3 + $0x5c0] sm:$0xff]
    %v748 = vld [vmem:[%s3 + $0x5c8] sm:$0xff]
    %v749 = vld [vmem:[%s3 + $0x5d0] sm:$0xff]
    %v750 = vld [vmem:[%s3 + $0x5d8] sm:$0xff]
    %v751 = vld [vmem:[%s3 + $0x5e0] sm:$0xff]
    %v752 = vld [vmem:[%s3 + $0x5e8] sm:$0xff]
    %v753 = vld [vmem:[%s3 + $0x5f0] sm:$0xff]
    %v754 = vld [vmem:[%s3 + $0x5f8] sm:$0xff]
    %v755 = vld [vmem:[%s4] sm:$0xf]
    %v757 = vlaneseq
    %v758 = vshrl.u32 %v757, 7
    %v759 = vsub.s32 0, %v758
    %v760 = vrot.slane %v755, %v759
    %v761 = vlaneseq
    %v762 = vshrl.u32 %v761, 7
    %v763 = vsub.s32 1, %v762
    %v764 = vrot.slane %v755, %v763
    %v765 = vlaneseq
    %v766 = vshrl.u32 %v765, 7
    %v767 = vsub.s32 2, %v766
    %v768 = vrot.slane %v755, %v767
    %v769 = vlaneseq
    %v770 = vshrl.u32 %v769, 7
    %v771 = vsub.s32 3, %v770
    %v772 = vrot.slane %v755, %v771
    %v969 = vunpack.c.l.b16 %v563
    %v970 = vunpack.c.h.b16 %v563
    %v971 = vunpack.c.l.b16 %v564
    %v972 = vunpack.c.h.b16 %v564
    %v973 = vunpack.c.l.b16 %v565
    %v974 = vunpack.c.h.b16 %v565
    %v975 = vunpack.c.l.b16 %v566
    %v976 = vunpack.c.h.b16 %v566
    %v977 = vunpack.c.l.b16 %v567
    %v978 = vunpack.c.h.b16 %v567
    %v979 = vunpack.c.l.b16 %v568
    %v980 = vunpack.c.h.b16 %v568
    %v981 = vunpack.c.l.b16 %v569
    %v982 = vunpack.c.h.b16 %v569
    %v983 = vunpack.c.l.b16 %v570
    %v984 = vunpack.c.h.b16 %v570
    %v985 = vunpack.c.l.b16 %v571
    %v986 = vunpack.c.h.b16 %v571
    %v987 = vunpack.c.l.b16 %v572
    %v988 = vunpack.c.h.b16 %v572
    %v989 = vunpack.c.l.b16 %v573
    %v990 = vunpack.c.h.b16 %v573
    %v991 = vunpack.c.l.b16 %v574
    %v992 = vunpack.c.h.b16 %v574
    %v993 = vunpack.c.l.b16 %v575
    %v994 = vunpack.c.h.b16 %v575
    %v995 = vunpack.c.l.b16 %v576
    %v996 = vunpack.c.h.b16 %v576
    %v997 = vunpack.c.l.b16 %v577
    %v998 = vunpack.c.h.b16 %v577
    %v999 = vunpack.c.l.b16 %v578
    %v1000 = vunpack.c.h.b16 %v578
    %v1001 = vunpack.c.l.b16 %v579
    %v1002 = vunpack.c.h.b16 %v579
    %v1003 = vunpack.c.l.b16 %v580
    %v1004 = vunpack.c.h.b16 %v580
    %v1005 = vunpack.c.l.b16 %v581
    %v1006 = vunpack.c.h.b16 %v581
    %v1007 = vunpack.c.l.b16 %v582
    %v1008 = vunpack.c.h.b16 %v582
    %v1009 = vunpack.c.l.b16 %v583
    %v1010 = vunpack.c.h.b16 %v583
    %v1011 = vunpack.c.l.b16 %v584
    %v1012 = vunpack.c.h.b16 %v584
    %v1013 = vunpack.c.l.b16 %v585
    %v1014 = vunpack.c.h.b16 %v585
    %v1015 = vunpack.c.l.b16 %v586
    %v1016 = vunpack.c.h.b16 %v586
    %v1017 = vunpack.c.l.b16 %v587
    %v1018 = vunpack.c.h.b16 %v587
    %v1019 = vunpack.c.l.b16 %v588
    %v1020 = vunpack.c.h.b16 %v588
    %v1021 = vunpack.c.l.b16 %v589
    %v1022 = vunpack.c.h.b16 %v589
    %v1023 = vunpack.c.l.b16 %v590
    %v1024 = vunpack.c.h.b16 %v590
    %v1025 = vunpack.c.l.b16 %v591
    %v1026 = vunpack.c.h.b16 %v591
    %v1027 = vunpack.c.l.b16 %v592
    %v1028 = vunpack.c.h.b16 %v592
    %v1029 = vunpack.c.l.b16 %v593
    %v1030 = vunpack.c.h.b16 %v593
    %v1031 = vunpack.c.l.b16 %v594
    %v1032 = vunpack.c.h.b16 %v594
    %v1033 = vunpack.c.l.b16 %v595
    %v1034 = vunpack.c.h.b16 %v595
    %v1035 = vunpack.c.l.b16 %v596
    %v1036 = vunpack.c.h.b16 %v596
    %v1037 = vunpack.c.l.b16 %v597
    %v1038 = vunpack.c.h.b16 %v597
    %v1039 = vunpack.c.l.b16 %v598
    %v1040 = vunpack.c.h.b16 %v598
    %v1041 = vunpack.c.l.b16 %v599
    %v1042 = vunpack.c.h.b16 %v599
    %v1043 = vunpack.c.l.b16 %v600
    %v1044 = vunpack.c.h.b16 %v600
    %v1045 = vunpack.c.l.b16 %v601
    %v1046 = vunpack.c.h.b16 %v601
    %v1047 = vunpack.c.l.b16 %v602
    %v1048 = vunpack.c.h.b16 %v602
    %v1049 = vunpack.c.l.b16 %v603
    %v1050 = vunpack.c.h.b16 %v603
    %v1051 = vunpack.c.l.b16 %v604
    %v1052 = vunpack.c.h.b16 %v604
    %v1053 = vunpack.c.l.b16 %v605
    %v1054 = vunpack.c.h.b16 %v605
    %v1055 = vunpack.c.l.b16 %v606
    %v1056 = vunpack.c.h.b16 %v606
    %v1057 = vunpack.c.l.b16 %v607
    %v1058 = vunpack.c.h.b16 %v607
    %v1059 = vunpack.c.l.b16 %v608
    %v1060 = vunpack.c.h.b16 %v608
    %v1061 = vunpack.c.l.b16 %v609
    %v1062 = vunpack.c.h.b16 %v609
    %v1063 = vunpack.c.l.b16 %v610
    %v1064 = vunpack.c.h.b16 %v610
    %v1065 = vunpack.c.l.b16 %v611
    %v1066 = vunpack.c.h.b16 %v611
    %v1067 = vunpack.c.l.b16 %v612
    %v1068 = vunpack.c.h.b16 %v612
    %v1069 = vunpack.c.l.b16 %v613
    %v1070 = vunpack.c.h.b16 %v613
    %v1071 = vunpack.c.l.b16 %v614
    %v1072 = vunpack.c.h.b16 %v614
    %v1073 = vunpack.c.l.b16 %v615
    %v1074 = vunpack.c.h.b16 %v615
    %v1075 = vunpack.c.l.b16 %v616
    %v1076 = vunpack.c.h.b16 %v616
    %v1077 = vunpack.c.l.b16 %v617
    %v1078 = vunpack.c.h.b16 %v617
    %v1079 = vunpack.c.l.b16 %v618
    %v1080 = vunpack.c.h.b16 %v618
    %v1081 = vunpack.c.l.b16 %v619
    %v1082 = vunpack.c.h.b16 %v619
    %v1083 = vunpack.c.l.b16 %v620
    %v1084 = vunpack.c.h.b16 %v620
    %v1085 = vunpack.c.l.b16 %v621
    %v1086 = vunpack.c.h.b16 %v621
    %v1087 = vunpack.c.l.b16 %v622
    %v1088 = vunpack.c.h.b16 %v622
    %v1089 = vunpack.c.l.b16 %v623
    %v1090 = vunpack.c.h.b16 %v623
    %v1091 = vunpack.c.l.b16 %v624
    %v1092 = vunpack.c.h.b16 %v624
    %v1093 = vunpack.c.l.b16 %v625
    %v1094 = vunpack.c.h.b16 %v625
    %v1095 = vunpack.c.l.b16 %v626
    %v1096 = vunpack.c.h.b16 %v626
    %v1097 = vunpack.c.l.b16 %v627
    %v1098 = vunpack.c.h.b16 %v627
    %v1099 = vunpack.c.l.b16 %v628
    %v1100 = vunpack.c.h.b16 %v628
    %v1101 = vunpack.c.l.b16 %v629
    %v1102 = vunpack.c.h.b16 %v629
    %v1103 = vunpack.c.l.b16 %v630
    %v1104 = vunpack.c.h.b16 %v630
    %v1105 = vunpack.c.l.b16 %v631
    %v1106 = vunpack.c.h.b16 %v631
    %v1107 = vunpack.c.l.b16 %v632
    %v1108 = vunpack.c.h.b16 %v632
    %v1109 = vunpack.c.l.b16 %v633
    %v1110 = vunpack.c.h.b16 %v633
    %v1111 = vunpack.c.l.b16 %v634
    %v1112 = vunpack.c.h.b16 %v634
    %v1113 = vunpack.c.l.b16 %v635
    %v1114 = vunpack.c.h.b16 %v635
    %v1115 = vunpack.c.l.b16 %v636
    %v1116 = vunpack.c.h.b16 %v636
    %v1117 = vunpack.c.l.b16 %v637
    %v1118 = vunpack.c.h.b16 %v637
    %v1119 = vunpack.c.l.b16 %v638
    %v1120 = vunpack.c.h.b16 %v638
    %v1121 = vunpack.c.l.b16 %v639
    %v1122 = vunpack.c.h.b16 %v639
    %v1123 = vunpack.c.l.b16 %v640
    %v1124 = vunpack.c.h.b16 %v640
    %v1125 = vunpack.c.l.b16 %v641
    %v1126 = vunpack.c.h.b16 %v641
    %v1127 = vunpack.c.l.b16 %v642
    %v1128 = vunpack.c.h.b16 %v642
    %v1129 = vunpack.c.l.b16 %v643
    %v1130 = vunpack.c.h.b16 %v643
    %v1131 = vunpack.c.l.b16 %v644
    %v1132 = vunpack.c.h.b16 %v644
    %v1133 = vunpack.c.l.b16 %v645
    %v1134 = vunpack.c.h.b16 %v645
    %v1135 = vunpack.c.l.b16 %v646
    %v1136 = vunpack.c.h.b16 %v646
    %v1137 = vunpack.c.l.b16 %v647
    %v1138 = vunpack.c.h.b16 %v647
    %v1139 = vunpack.c.l.b16 %v648
    %v1140 = vunpack.c.h.b16 %v648
    %v1141 = vunpack.c.l.b16 %v649
    %v1142 = vunpack.c.h.b16 %v649
    %v1143 = vunpack.c.l.b16 %v650
    %v1144 = vunpack.c.h.b16 %v650
    %v1145 = vunpack.c.l.b16 %v651
    %v1146 = vunpack.c.h.b16 %v651
    %v1147 = vunpack.c.l.b16 %v652
    %v1148 = vunpack.c.h.b16 %v652
    %v1149 = vunpack.c.l.b16 %v653
    %v1150 = vunpack.c.h.b16 %v653
    %v1151 = vunpack.c.l.b16 %v654
    %v1152 = vunpack.c.h.b16 %v654
    %v1153 = vunpack.c.l.b16 %v655
    %v1154 = vunpack.c.h.b16 %v655
    %v1155 = vunpack.c.l.b16 %v656
    %v1156 = vunpack.c.h.b16 %v656
    %v1157 = vunpack.c.l.b16 %v657
    %v1158 = vunpack.c.h.b16 %v657
    %v1159 = vunpack.c.l.b16 %v658
    %v1160 = vunpack.c.h.b16 %v658
    %v1161 = vunpack.c.l.b16 %v659
    %v1162 = vunpack.c.h.b16 %v659
    %v1163 = vunpack.c.l.b16 %v660
    %v1164 = vunpack.c.h.b16 %v660
    %v1165 = vunpack.c.l.b16 %v661
    %v1166 = vunpack.c.h.b16 %v661
    %v1167 = vunpack.c.l.b16 %v662
    %v1168 = vunpack.c.h.b16 %v662
    %v1169 = vunpack.c.l.b16 %v663
    %v1170 = vunpack.c.h.b16 %v663
    %v1171 = vunpack.c.l.b16 %v664
    %v1172 = vunpack.c.h.b16 %v664
    %v1173 = vunpack.c.l.b16 %v665
    %v1174 = vunpack.c.h.b16 %v665
    %v1175 = vunpack.c.l.b16 %v666
    %v1176 = vunpack.c.h.b16 %v666
    %v1177 = vunpack.c.l.b16 %v667
    %v1178 = vunpack.c.h.b16 %v667
    %v1179 = vunpack.c.l.b16 %v668
    %v1180 = vunpack.c.h.b16 %v668
    %v1181 = vunpack.c.l.b16 %v669
    %v1182 = vunpack.c.h.b16 %v669
    %v1183 = vunpack.c.l.b16 %v670
    %v1184 = vunpack.c.h.b16 %v670
    %v1185 = vunpack.c.l.b16 %v671
    %v1186 = vunpack.c.h.b16 %v671
    %v1187 = vunpack.c.l.b16 %v672
    %v1188 = vunpack.c.h.b16 %v672
    %v1189 = vunpack.c.l.b16 %v673
    %v1190 = vunpack.c.h.b16 %v673
    %v1191 = vunpack.c.l.b16 %v674
    %v1192 = vunpack.c.h.b16 %v674
    %v1193 = vunpack.c.l.b16 %v675
    %v1194 = vunpack.c.h.b16 %v675
    %v1195 = vunpack.c.l.b16 %v676
    %v1196 = vunpack.c.h.b16 %v676
    %v1197 = vunpack.c.l.b16 %v677
    %v1198 = vunpack.c.h.b16 %v677
    %v1199 = vunpack.c.l.b16 %v678
    %v1200 = vunpack.c.h.b16 %v678
    %v1201 = vunpack.c.l.b16 %v679
    %v1202 = vunpack.c.h.b16 %v679
    %v1203 = vunpack.c.l.b16 %v680
    %v1204 = vunpack.c.h.b16 %v680
    %v1205 = vunpack.c.l.b16 %v681
    %v1206 = vunpack.c.h.b16 %v681
    %v1207 = vunpack.c.l.b16 %v682
    %v1208 = vunpack.c.h.b16 %v682
    %v1209 = vunpack.c.l.b16 %v683
    %v1210 = vunpack.c.h.b16 %v683
    %v1211 = vunpack.c.l.b16 %v684
    %v1212 = vunpack.c.h.b16 %v684
    %v1213 = vunpack.c.l.b16 %v685
    %v1214 = vunpack.c.h.b16 %v685
    %v1215 = vunpack.c.l.b16 %v686
    %v1216 = vunpack.c.h.b16 %v686
    %v1217 = vunpack.c.l.b16 %v687
    %v1218 = vunpack.c.h.b16 %v687
    %v1219 = vunpack.c.l.b16 %v688
    %v1220 = vunpack.c.h.b16 %v688
    %v1221 = vunpack.c.l.b16 %v689
    %v1222 = vunpack.c.h.b16 %v689
    %v1223 = vunpack.c.l.b16 %v690
    %v1224 = vunpack.c.h.b16 %v690
    %v1225 = vunpack.c.l.b16 %v691
    %v1226 = vunpack.c.h.b16 %v691
    %v1227 = vunpack.c.l.b16 %v692
    %v1228 = vunpack.c.h.b16 %v692
    %v1229 = vunpack.c.l.b16 %v693
    %v1230 = vunpack.c.h.b16 %v693
    %v1231 = vunpack.c.l.b16 %v694
    %v1232 = vunpack.c.h.b16 %v694
    %v1233 = vunpack.c.l.b16 %v695
    %v1234 = vunpack.c.h.b16 %v695
    %v1235 = vunpack.c.l.b16 %v696
    %v1236 = vunpack.c.h.b16 %v696
    %v1237 = vunpack.c.l.b16 %v697
    %v1238 = vunpack.c.h.b16 %v697
    %v1239 = vunpack.c.l.b16 %v698
    %v1240 = vunpack.c.h.b16 %v698
    %v1241 = vunpack.c.l.b16 %v699
    %v1242 = vunpack.c.h.b16 %v699
    %v1243 = vunpack.c.l.b16 %v700
    %v1244 = vunpack.c.h.b16 %v700
    %v1245 = vunpack.c.l.b16 %v701
    %v1246 = vunpack.c.h.b16 %v701
    %v1247 = vunpack.c.l.b16 %v702
    %v1248 = vunpack.c.h.b16 %v702
    %v1249 = vunpack.c.l.b16 %v703
    %v1250 = vunpack.c.h.b16 %v703
    %v1251 = vunpack.c.l.b16 %v704
    %v1252 = vunpack.c.h.b16 %v704
    %v1253 = vunpack.c.l.b16 %v705
    %v1254 = vunpack.c.h.b16 %v705
    %v1255 = vunpack.c.l.b16 %v706
    %v1256 = vunpack.c.h.b16 %v706
    %v1257 = vunpack.c.l.b16 %v707
    %v1258 = vunpack.c.h.b16 %v707
    %v1259 = vunpack.c.l.b16 %v708
    %v1260 = vunpack.c.h.b16 %v708
    %v1261 = vunpack.c.l.b16 %v709
    %v1262 = vunpack.c.h.b16 %v709
    %v1263 = vunpack.c.l.b16 %v710
    %v1264 = vunpack.c.h.b16 %v710
    %v1265 = vunpack.c.l.b16 %v711
    %v1266 = vunpack.c.h.b16 %v711
    %v1267 = vunpack.c.l.b16 %v712
    %v1268 = vunpack.c.h.b16 %v712
    %v1269 = vunpack.c.l.b16 %v713
    %v1270 = vunpack.c.h.b16 %v713
    %v1271 = vunpack.c.l.b16 %v714
    %v1272 = vunpack.c.h.b16 %v714
    %v1273 = vunpack.c.l.b16 %v715
    %v1274 = vunpack.c.h.b16 %v715
    %v1275 = vunpack.c.l.b16 %v716
    %v1276 = vunpack.c.h.b16 %v716
    %v1277 = vunpack.c.l.b16 %v717
    %v1278 = vunpack.c.h.b16 %v717
    %v1279 = vunpack.c.l.b16 %v718
    %v1280 = vunpack.c.h.b16 %v718
    %v1281 = vunpack.c.l.b16 %v719
    %v1282 = vunpack.c.h.b16 %v719
    %v1283 = vunpack.c.l.b16 %v720
    %v1284 = vunpack.c.h.b16 %v720
    %v1285 = vunpack.c.l.b16 %v721
    %v1286 = vunpack.c.h.b16 %v721
    %v1287 = vunpack.c.l.b16 %v722
    %v1288 = vunpack.c.h.b16 %v722
    %v1289 = vunpack.c.l.b16 %v723
    %v1290 = vunpack.c.h.b16 %v723
    %v1291 = vunpack.c.l.b16 %v724
    %v1292 = vunpack.c.h.b16 %v724
    %v1293 = vunpack.c.l.b16 %v725
    %v1294 = vunpack.c.h.b16 %v725
    %v1295 = vunpack.c.l.b16 %v726
    %v1296 = vunpack.c.h.b16 %v726
    %v1297 = vunpack.c.l.b16 %v727
    %v1298 = vunpack.c.h.b16 %v727
    %v1299 = vunpack.c.l.b16 %v728
    %v1300 = vunpack.c.h.b16 %v728
    %v1301 = vunpack.c.l.b16 %v729
    %v1302 = vunpack.c.h.b16 %v729
    %v1303 = vunpack.c.l.b16 %v730
    %v1304 = vunpack.c.h.b16 %v730
    %v1305 = vunpack.c.l.b16 %v731
    %v1306 = vunpack.c.h.b16 %v731
    %v1307 = vunpack.c.l.b16 %v732
    %v1308 = vunpack.c.h.b16 %v732
    %v1309 = vunpack.c.l.b16 %v733
    %v1310 = vunpack.c.h.b16 %v733
    %v1311 = vunpack.c.l.b16 %v734
    %v1312 = vunpack.c.h.b16 %v734
    %v1313 = vunpack.c.l.b16 %v735
    %v1314 = vunpack.c.h.b16 %v735
    %v1315 = vunpack.c.l.b16 %v736
    %v1316 = vunpack.c.h.b16 %v736
    %v1317 = vunpack.c.l.b16 %v737
    %v1318 = vunpack.c.h.b16 %v737
    %v1319 = vunpack.c.l.b16 %v738
    %v1320 = vunpack.c.h.b16 %v738
    %v1321 = vunpack.c.l.b16 %v739
    %v1322 = vunpack.c.h.b16 %v739
    %v1323 = vunpack.c.l.b16 %v740
    %v1324 = vunpack.c.h.b16 %v740
    %v1325 = vunpack.c.l.b16 %v741
    %v1326 = vunpack.c.h.b16 %v741
    %v1327 = vunpack.c.l.b16 %v742
    %v1328 = vunpack.c.h.b16 %v742
    %v1329 = vunpack.c.l.b16 %v743
    %v1330 = vunpack.c.h.b16 %v743
    %v1331 = vunpack.c.l.b16 %v744
    %v1332 = vunpack.c.h.b16 %v744
    %v1333 = vunpack.c.l.b16 %v745
    %v1334 = vunpack.c.h.b16 %v745
    %v1335 = vunpack.c.l.b16 %v746
    %v1336 = vunpack.c.h.b16 %v746
    %v1337 = vunpack.c.l.b16 %v747
    %v1338 = vunpack.c.h.b16 %v747
    %v1339 = vunpack.c.l.b16 %v748
    %v1340 = vunpack.c.h.b16 %v748
    %v1341 = vunpack.c.l.b16 %v749
    %v1342 = vunpack.c.h.b16 %v749
    %v1343 = vunpack.c.l.b16 %v750
    %v1344 = vunpack.c.h.b16 %v750
    %v1345 = vunpack.c.l.b16 %v751
    %v1346 = vunpack.c.h.b16 %v751
    %v1347 = vunpack.c.l.b16 %v752
    %v1348 = vunpack.c.h.b16 %v752
    %v1349 = vunpack.c.l.b16 %v753
    %v1350 = vunpack.c.h.b16 %v753
    %v1351 = vunpack.c.l.b16 %v754
    %v1352 = vunpack.c.h.b16 %v754
    %v1353 = vpack.c.b16 %v973, %v969
    %v1354 = vpack.c.b16 %v974, %v970
    %v1355 = vpack.c.b16 %v975, %v971
    %v1356 = vpack.c.b16 %v976, %v972
    %v1357 = vpack.c.b16 %v981, %v977
    %v1358 = vpack.c.b16 %v982, %v978
    %v1359 = vpack.c.b16 %v983, %v979
    %v1360 = vpack.c.b16 %v984, %v980
    %v1361 = vpack.c.b16 %v989, %v985
    %v1362 = vpack.c.b16 %v990, %v986
    %v1363 = vpack.c.b16 %v991, %v987
    %v1364 = vpack.c.b16 %v992, %v988
    %v1365 = vpack.c.b16 %v997, %v993
    %v1366 = vpack.c.b16 %v998, %v994
    %v1367 = vpack.c.b16 %v999, %v995
    %v1368 = vpack.c.b16 %v1000, %v996
    %v1369 = vpack.c.b16 %v1005, %v1001
    %v1370 = vpack.c.b16 %v1006, %v1002
    %v1371 = vpack.c.b16 %v1007, %v1003
    %v1372 = vpack.c.b16 %v1008, %v1004
    %v1373 = vpack.c.b16 %v1013, %v1009
    %v1374 = vpack.c.b16 %v1014, %v1010
    %v1375 = vpack.c.b16 %v1015, %v1011
    %v1376 = vpack.c.b16 %v1016, %v1012
    %v1377 = vpack.c.b16 %v1021, %v1017
    %v1378 = vpack.c.b16 %v1022, %v1018
    %v1379 = vpack.c.b16 %v1023, %v1019
    %v1380 = vpack.c.b16 %v1024, %v1020
    %v1381 = vpack.c.b16 %v1029, %v1025
    %v1382 = vpack.c.b16 %v1030, %v1026
    %v1383 = vpack.c.b16 %v1031, %v1027
    %v1384 = vpack.c.b16 %v1032, %v1028
    %v1385 = vpack.c.b16 %v1037, %v1033
    %v1386 = vpack.c.b16 %v1038, %v1034
    %v1387 = vpack.c.b16 %v1039, %v1035
    %v1388 = vpack.c.b16 %v1040, %v1036
    %v1389 = vpack.c.b16 %v1045, %v1041
    %v1390 = vpack.c.b16 %v1046, %v1042
    %v1391 = vpack.c.b16 %v1047, %v1043
    %v1392 = vpack.c.b16 %v1048, %v1044
    %v1393 = vpack.c.b16 %v1053, %v1049
    %v1394 = vpack.c.b16 %v1054, %v1050
    %v1395 = vpack.c.b16 %v1055, %v1051
    %v1396 = vpack.c.b16 %v1056, %v1052
    %v1397 = vpack.c.b16 %v1061, %v1057
    %v1398 = vpack.c.b16 %v1062, %v1058
    %v1399 = vpack.c.b16 %v1063, %v1059
    %v1400 = vpack.c.b16 %v1064, %v1060
    %v1401 = vpack.c.b16 %v1069, %v1065
    %v1402 = vpack.c.b16 %v1070, %v1066
    %v1403 = vpack.c.b16 %v1071, %v1067
    %v1404 = vpack.c.b16 %v1072, %v1068
    %v1405 = vpack.c.b16 %v1077, %v1073
    %v1406 = vpack.c.b16 %v1078, %v1074
    %v1407 = vpack.c.b16 %v1079, %v1075
    %v1408 = vpack.c.b16 %v1080, %v1076
    %v1409 = vpack.c.b16 %v1085, %v1081
    %v1410 = vpack.c.b16 %v1086, %v1082
    %v1411 = vpack.c.b16 %v1087, %v1083
    %v1412 = vpack.c.b16 %v1088, %v1084
    %v1413 = vpack.c.b16 %v1093, %v1089
    %v1414 = vpack.c.b16 %v1094, %v1090
    %v1415 = vpack.c.b16 %v1095, %v1091
    %v1416 = vpack.c.b16 %v1096, %v1092
    %v1417 = vpack.c.b16 %v1101, %v1097
    %v1418 = vpack.c.b16 %v1102, %v1098
    %v1419 = vpack.c.b16 %v1103, %v1099
    %v1420 = vpack.c.b16 %v1104, %v1100
    %v1421 = vpack.c.b16 %v1109, %v1105
    %v1422 = vpack.c.b16 %v1110, %v1106
    %v1423 = vpack.c.b16 %v1111, %v1107
    %v1424 = vpack.c.b16 %v1112, %v1108
    %v1425 = vpack.c.b16 %v1117, %v1113
    %v1426 = vpack.c.b16 %v1118, %v1114
    %v1427 = vpack.c.b16 %v1119, %v1115
    %v1428 = vpack.c.b16 %v1120, %v1116
    %v1429 = vpack.c.b16 %v1125, %v1121
    %v1430 = vpack.c.b16 %v1126, %v1122
    %v1431 = vpack.c.b16 %v1127, %v1123
    %v1432 = vpack.c.b16 %v1128, %v1124
    %v1433 = vpack.c.b16 %v1133, %v1129
    %v1434 = vpack.c.b16 %v1134, %v1130
    %v1435 = vpack.c.b16 %v1135, %v1131
    %v1436 = vpack.c.b16 %v1136, %v1132
    %v1437 = vpack.c.b16 %v1141, %v1137
    %v1438 = vpack.c.b16 %v1142, %v1138
    %v1439 = vpack.c.b16 %v1143, %v1139
    %v1440 = vpack.c.b16 %v1144, %v1140
    %v1441 = vpack.c.b16 %v1149, %v1145
    %v1442 = vpack.c.b16 %v1150, %v1146
    %v1443 = vpack.c.b16 %v1151, %v1147
    %v1444 = vpack.c.b16 %v1152, %v1148
    %v1445 = vpack.c.b16 %v1157, %v1153
    %v1446 = vpack.c.b16 %v1158, %v1154
    %v1447 = vpack.c.b16 %v1159, %v1155
    %v1448 = vpack.c.b16 %v1160, %v1156
    %v1449 = vpack.c.b16 %v1165, %v1161
    %v1450 = vpack.c.b16 %v1166, %v1162
    %v1451 = vpack.c.b16 %v1167, %v1163
    %v1452 = vpack.c.b16 %v1168, %v1164
    %v1453 = vpack.c.b16 %v1173, %v1169
    %v1454 = vpack.c.b16 %v1174, %v1170
    %v1455 = vpack.c.b16 %v1175, %v1171
    %v1456 = vpack.c.b16 %v1176, %v1172
    %v1457 = vpack.c.b16 %v1181, %v1177
    %v1458 = vpack.c.b16 %v1182, %v1178
    %v1459 = vpack.c.b16 %v1183, %v1179
    %v1460 = vpack.c.b16 %v1184, %v1180
    %v1461 = vpack.c.b16 %v1189, %v1185
    %v1462 = vpack.c.b16 %v1190, %v1186
    %v1463 = vpack.c.b16 %v1191, %v1187
    %v1464 = vpack.c.b16 %v1192, %v1188
    %v1465 = vpack.c.b16 %v1197, %v1193
    %v1466 = vpack.c.b16 %v1198, %v1194
    %v1467 = vpack.c.b16 %v1199, %v1195
    %v1468 = vpack.c.b16 %v1200, %v1196
    %v1469 = vpack.c.b16 %v1205, %v1201
    %v1470 = vpack.c.b16 %v1206, %v1202
    %v1471 = vpack.c.b16 %v1207, %v1203
    %v1472 = vpack.c.b16 %v1208, %v1204
    %v1473 = vpack.c.b16 %v1213, %v1209
    %v1474 = vpack.c.b16 %v1214, %v1210
    %v1475 = vpack.c.b16 %v1215, %v1211
    %v1476 = vpack.c.b16 %v1216, %v1212
    %v1477 = vpack.c.b16 %v1221, %v1217
    %v1478 = vpack.c.b16 %v1222, %v1218
    %v1479 = vpack.c.b16 %v1223, %v1219
    %v1480 = vpack.c.b16 %v1224, %v1220
    %v1481 = vpack.c.b16 %v1229, %v1225
    %v1482 = vpack.c.b16 %v1230, %v1226
    %v1483 = vpack.c.b16 %v1231, %v1227
    %v1484 = vpack.c.b16 %v1232, %v1228
    %v1485 = vpack.c.b16 %v1237, %v1233
    %v1486 = vpack.c.b16 %v1238, %v1234
    %v1487 = vpack.c.b16 %v1239, %v1235
    %v1488 = vpack.c.b16 %v1240, %v1236
    %v1489 = vpack.c.b16 %v1245, %v1241
    %v1490 = vpack.c.b16 %v1246, %v1242
    %v1491 = vpack.c.b16 %v1247, %v1243
    %v1492 = vpack.c.b16 %v1248, %v1244
    %v1493 = vpack.c.b16 %v1253, %v1249
    %v1494 = vpack.c.b16 %v1254, %v1250
    %v1495 = vpack.c.b16 %v1255, %v1251
    %v1496 = vpack.c.b16 %v1256, %v1252
    %v1497 = vpack.c.b16 %v1261, %v1257
    %v1498 = vpack.c.b16 %v1262, %v1258
    %v1499 = vpack.c.b16 %v1263, %v1259
    %v1500 = vpack.c.b16 %v1264, %v1260
    %v1501 = vpack.c.b16 %v1269, %v1265
    %v1502 = vpack.c.b16 %v1270, %v1266
    %v1503 = vpack.c.b16 %v1271, %v1267
    %v1504 = vpack.c.b16 %v1272, %v1268
    %v1505 = vpack.c.b16 %v1277, %v1273
    %v1506 = vpack.c.b16 %v1278, %v1274
    %v1507 = vpack.c.b16 %v1279, %v1275
    %v1508 = vpack.c.b16 %v1280, %v1276
    %v1509 = vpack.c.b16 %v1285, %v1281
    %v1510 = vpack.c.b16 %v1286, %v1282
    %v1511 = vpack.c.b16 %v1287, %v1283
    %v1512 = vpack.c.b16 %v1288, %v1284
    %v1513 = vpack.c.b16 %v1293, %v1289
    %v1514 = vpack.c.b16 %v1294, %v1290
    %v1515 = vpack.c.b16 %v1295, %v1291
    %v1516 = vpack.c.b16 %v1296, %v1292
    %v1517 = vpack.c.b16 %v1301, %v1297
    %v1518 = vpack.c.b16 %v1302, %v1298
    %v1519 = vpack.c.b16 %v1303, %v1299
    %v1520 = vpack.c.b16 %v1304, %v1300
    %v1521 = vpack.c.b16 %v1309, %v1305
    %v1522 = vpack.c.b16 %v1310, %v1306
    %v1523 = vpack.c.b16 %v1311, %v1307
    %v1524 = vpack.c.b16 %v1312, %v1308
    %v1525 = vpack.c.b16 %v1317, %v1313
    %v1526 = vpack.c.b16 %v1318, %v1314
    %v1527 = vpack.c.b16 %v1319, %v1315
    %v1528 = vpack.c.b16 %v1320, %v1316
    %v1529 = vpack.c.b16 %v1325, %v1321
    %v1530 = vpack.c.b16 %v1326, %v1322
    %v1531 = vpack.c.b16 %v1327, %v1323
    %v1532 = vpack.c.b16 %v1328, %v1324
    %v1533 = vpack.c.b16 %v1333, %v1329
    %v1534 = vpack.c.b16 %v1334, %v1330
    %v1535 = vpack.c.b16 %v1335, %v1331
    %v1536 = vpack.c.b16 %v1336, %v1332
    %v1537 = vpack.c.b16 %v1341, %v1337
    %v1538 = vpack.c.b16 %v1342, %v1338
    %v1539 = vpack.c.b16 %v1343, %v1339
    %v1540 = vpack.c.b16 %v1344, %v1340
    %v1541 = vpack.c.b16 %v1349, %v1345
    %v1542 = vpack.c.b16 %v1350, %v1346
    %v1543 = vpack.c.b16 %v1351, %v1347
    %v1544 = vpack.c.b16 %v1352, %v1348
    %1737 = vmatprep.subr.bf16.mxu0 %v1354
    %1738 = vmatpush1.bf16.msra.mxu0 %v1353
    %1739 = vmatprep.subr.bf16.mxu0 %v1358
    %1740 = vmatpush1.bf16.msra.mxu0 %v1357
    %1741 = vmatprep.subr.bf16.mxu0 %v1362
    %1742 = vmatpush1.bf16.msra.mxu0 %v1361
    %1743 = vmatprep.subr.bf16.mxu0 %v1366
    %1744 = vmatpush1.bf16.msra.mxu0 %v1365
    %1745 = vmatprep.subr.bf16.mxu0 %v1370
    %1746 = vmatpush1.bf16.msra.mxu0 %v1369
    %1747 = vmatprep.subr.bf16.mxu0 %v1374
    %1748 = vmatpush1.bf16.msra.mxu0 %v1373
    %1749 = vmatprep.subr.bf16.mxu0 %v1378
    %1750 = vmatpush1.bf16.msra.mxu0 %v1377
    %1751 = vmatprep.subr.bf16.mxu0 %v1382
    %1752 = vmatpush1.bf16.msra.mxu0 %v1381
    %1753 = vmatprep.subr.bf16.mxu0 %v1386
    %1754 = vmatpush1.bf16.msra.mxu0 %v1385
    %1755 = vmatprep.subr.bf16.mxu0 %v1390
    %1756 = vmatpush1.bf16.msra.mxu0 %v1389
    %1757 = vmatprep.subr.bf16.mxu0 %v1394
    %1758 = vmatpush1.bf16.msra.mxu0 %v1393
    %1759 = vmatprep.subr.bf16.mxu0 %v1398
    %1760 = vmatpush1.bf16.msra.mxu0 %v1397
    %1761 = vmatprep.subr.bf16.mxu0 %v1402
    %1762 = vmatpush1.bf16.msra.mxu0 %v1401
    %1763 = vmatprep.subr.bf16.mxu0 %v1406
    %1764 = vmatpush1.bf16.msra.mxu0 %v1405
    %1765 = vmatprep.subr.bf16.mxu0 %v1410
    %1766 = vmatpush1.bf16.msra.mxu0 %v1409
    %1767 = vmatprep.subr.bf16.mxu0 %v1414
    %1768 = vmatpush1.bf16.msra.mxu0 %v1413
    %1769 = vmatprep.mubr.bf16.mxu0 %v558
    %1770 = vmatmul.mubr.bf16.gmra.mrb[0].mxu0 %v557
    %v1771 = vpop.f32.mrb[0].mxu0
    %v1772 = vadd.f32 %v760, %v1771
    %v1773 = vpop.f32.mrb[0].mxu0
    %v1774 = vadd.f32 %v764, %v1773
    %v1775 = vpop.f32.mrb[0].mxu0
    %v1776 = vadd.f32 %v760, %v1775
    %v1777 = vpop.f32.mrb[0].mxu0
    %v1778 = vadd.f32 %v764, %v1777
    %1779 = vdwg.mxu0
    %1780 = vmatprep.subr.bf16.mxu0 %v1418
    %1781 = vmatpush1.bf16.msra.mxu0 %v1417
    %1782 = vmatprep.subr.bf16.mxu0 %v1422
    %1783 = vmatpush1.bf16.msra.mxu0 %v1421
    %1784 = vmatprep.subr.bf16.mxu0 %v1426
    %1785 = vmatpush1.bf16.msra.mxu0 %v1425
    %1786 = vmatprep.subr.bf16.mxu0 %v1430
    %1787 = vmatpush1.bf16.msra.mxu0 %v1429
    %1788 = vmatprep.subr.bf16.mxu0 %v1434
    %1789 = vmatpush1.bf16.msra.mxu0 %v1433
    %1790 = vmatprep.subr.bf16.mxu0 %v1438
    %1791 = vmatpush1.bf16.msra.mxu0 %v1437
    %1792 = vmatprep.subr.bf16.mxu0 %v1442
    %1793 = vmatpush1.bf16.msra.mxu0 %v1441
    %1794 = vmatprep.subr.bf16.mxu0 %v1446
    %1795 = vmatpush1.bf16.msra.mxu0 %v1445
    %1796 = vmatprep.subr.bf16.mxu0 %v1450
    %1797 = vmatpush1.bf16.msra.mxu0 %v1449
    %1798 = vmatprep.subr.bf16.mxu0 %v1454
    %1799 = vmatpush1.bf16.msra.mxu0 %v1453
    %1800 = vmatprep.subr.bf16.mxu0 %v1458
    %1801 = vmatpush1.bf16.msra.mxu0 %v1457
    %1802 = vmatprep.subr.bf16.mxu0 %v1462
    %1803 = vmatpush1.bf16.msra.mxu0 %v1461
    %1804 = vmatprep.subr.bf16.mxu0 %v1466
    %1805 = vmatpush1.bf16.msra.mxu0 %v1465
    %1806 = vmatprep.subr.bf16.mxu0 %v1470
    %1807 = vmatpush1.bf16.msra.mxu0 %v1469
    %1808 = vmatprep.subr.bf16.mxu0 %v1474
    %1809 = vmatpush1.bf16.msra.mxu0 %v1473
    %1810 = vmatprep.subr.bf16.mxu0 %v1478
    %1811 = vmatpush1.bf16.msra.mxu0 %v1477
    %1812 = vmatprep.mubr.bf16.mxu0 %v560
    %1813 = vmatmul.mubr.bf16.gmra.mrb[0].mxu0 %v559
    %v1814 = vpop.f32.mrb[0].mxu0
    %v1815 = vadd.f32 %v1772, %v1814
    %v1816 = vpop.f32.mrb[0].mxu0
    %v1817 = vadd.f32 %v1774, %v1816
    %v1818 = vpop.f32.mrb[0].mxu0
    %v1819 = vadd.f32 %v1776, %v1818
    %v1820 = vpop.f32.mrb[0].mxu0
    %v1821 = vadd.f32 %v1778, %v1820
    %1822 = vdwg.mxu0
    %1823 = vmatprep.subr.bf16.mxu0 %v1482
    %1824 = vmatpush1.bf16.msra.mxu0 %v1481
    %1825 = vmatprep.subr.bf16.mxu0 %v1486
    %1826 = vmatpush1.bf16.msra.mxu0 %v1485
    %1827 = vmatprep.subr.bf16.mxu0 %v1490
    %1828 = vmatpush1.bf16.msra.mxu0 %v1489
    %1829 = vmatprep.subr.bf16.mxu0 %v1494
    %1830 = vmatpush1.bf16.msra.mxu0 %v1493
    %1831 = vmatprep.subr.bf16.mxu0 %v1498
    %1832 = vmatpush1.bf16.msra.mxu0 %v1497
    %1833 = vmatprep.subr.bf16.mxu0 %v1502
    %1834 = vmatpush1.bf16.msra.mxu0 %v1501
    %1835 = vmatprep.subr.bf16.mxu0 %v1506
    %1836 = vmatpush1.bf16.msra.mxu0 %v1505
    %1837 = vmatprep.subr.bf16.mxu0 %v1510
    %1838 = vmatpush1.bf16.msra.mxu0 %v1509
    %1839 = vmatprep.subr.bf16.mxu0 %v1514
    %1840 = vmatpush1.bf16.msra.mxu0 %v1513
    %1841 = vmatprep.subr.bf16.mxu0 %v1518
    %1842 = vmatpush1.bf16.msra.mxu0 %v1517
    %1843 = vmatprep.subr.bf16.mxu0 %v1522
    %1844 = vmatpush1.bf16.msra.mxu0 %v1521
    %1845 = vmatprep.subr.bf16.mxu0 %v1526
    %1846 = vmatpush1.bf16.msra.mxu0 %v1525
    %1847 = vmatprep.subr.bf16.mxu0 %v1530
    %1848 = vmatpush1.bf16.msra.mxu0 %v1529
    %1849 = vmatprep.subr.bf16.mxu0 %v1534
    %1850 = vmatpush1.bf16.msra.mxu0 %v1533
    %1851 = vmatprep.subr.bf16.mxu0 %v1538
    %1852 = vmatpush1.bf16.msra.mxu0 %v1537
    %1853 = vmatprep.subr.bf16.mxu0 %v1542
    %1854 = vmatpush1.bf16.msra.mxu0 %v1541
    %1855 = vmatprep.mubr.bf16.mxu0 %v562
    %1856 = vmatmul.mubr.bf16.gmra.mrb[0].mxu0 %v561
    %v1857 = vpop.f32.mrb[0].mxu0
    %v1858 = vadd.f32 %v1815, %v1857
    %v1859 = vpop.f32.mrb[0].mxu0
    %v1860 = vadd.f32 %v1817, %v1859
    %v1861 = vpop.f32.mrb[0].mxu0
    %v1862 = vadd.f32 %v1819, %v1861
    %v1863 = vpop.f32.mrb[0].mxu0
    %v1864 = vadd.f32 %v1821, %v1863
    %1865 = vdwg.mxu0
    %1866 = vmatprep.subr.bf16.mxu0 %v1356
    %1867 = vmatpush1.bf16.msra.mxu0 %v1355
    %1868 = vmatprep.subr.bf16.mxu0 %v1360
    %1869 = vmatpush1.bf16.msra.mxu0 %v1359
    %1870 = vmatprep.subr.bf16.mxu0 %v1364
    %1871 = vmatpush1.bf16.msra.mxu0 %v1363
    %1872 = vmatprep.subr.bf16.mxu0 %v1368
    %1873 = vmatpush1.bf16.msra.mxu0 %v1367
    %1874 = vmatprep.subr.bf16.mxu0 %v1372
    %1875 = vmatpush1.bf16.msra.mxu0 %v1371
    %1876 = vmatprep.subr.bf16.mxu0 %v1376
    %1877 = vmatpush1.bf16.msra.mxu0 %v1375
    %1878 = vmatprep.subr.bf16.mxu0 %v1380
    %1879 = vmatpush1.bf16.msra.mxu0 %v1379
    %1880 = vmatprep.subr.bf16.mxu0 %v1384
    %1881 = vmatpush1.bf16.msra.mxu0 %v1383
    %1882 = vmatprep.subr.bf16.mxu0 %v1388
    %1883 = vmatpush1.bf16.msra.mxu0 %v1387
    %1884 = vmatprep.subr.bf16.mxu0 %v1392
    %1885 = vmatpush1.bf16.msra.mxu0 %v1391
    %1886 = vmatprep.subr.bf16.mxu0 %v1396
    %1887 = vmatpush1.bf16.msra.mxu0 %v1395
    %1888 = vmatprep.subr.bf16.mxu0 %v1400
    %1889 = vmatpush1.bf16.msra.mxu0 %v1399
    %1890 = vmatprep.subr.bf16.mxu0 %v1404
    %1891 = vmatpush1.bf16.msra.mxu0 %v1403
    %1892 = vmatprep.subr.bf16.mxu0 %v1408
    %1893 = vmatpush1.bf16.msra.mxu0 %v1407
    %1894 = vmatprep.subr.bf16.mxu0 %v1412
    %1895 = vmatpush1.bf16.msra.mxu0 %v1411
    %1896 = vmatprep.subr.bf16.mxu0 %v1416
    %1897 = vmatpush1.bf16.msra.mxu0 %v1415
    %1898 = vmatprep.mubr.bf16.mxu0 %v558
    %1899 = vmatmul.mubr.bf16.gmra.mrb[0].mxu0 %v557
    %v1900 = vpop.f32.mrb[0].mxu0
    %v1901 = vadd.f32 %v768, %v1900
    %v1902 = vpop.f32.mrb[0].mxu0
    %v1903 = vadd.f32 %v772, %v1902
    %v1904 = vpop.f32.mrb[0].mxu0
    %v1905 = vadd.f32 %v768, %v1904
    %v1906 = vpop.f32.mrb[0].mxu0
    %v1907 = vadd.f32 %v772, %v1906
    %1908 = vdwg.mxu0
    %1909 = vmatprep.subr.bf16.mxu0 %v1420
    %1910 = vmatpush1.bf16.msra.mxu0 %v1419
    %1911 = vmatprep.subr.bf16.mxu0 %v1424
    %1912 = vmatpush1.bf16.msra.mxu0 %v1423
    %1913 = vmatprep.subr.bf16.mxu0 %v1428
    %1914 = vmatpush1.bf16.msra.mxu0 %v1427
    %1915 = vmatprep.subr.bf16.mxu0 %v1432
    %1916 = vmatpush1.bf16.msra.mxu0 %v1431
    %1917 = vmatprep.subr.bf16.mxu0 %v1436
    %1918 = vmatpush1.bf16.msra.mxu0 %v1435
    %1919 = vmatprep.subr.bf16.mxu0 %v1440
    %1920 = vmatpush1.bf16.msra.mxu0 %v1439
    %1921 = vmatprep.subr.bf16.mxu0 %v1444
    %1922 = vmatpush1.bf16.msra.mxu0 %v1443
    %1923 = vmatprep.subr.bf16.mxu0 %v1448
    %1924 = vmatpush1.bf16.msra.mxu0 %v1447
    %1925 = vmatprep.subr.bf16.mxu0 %v1452
    %1926 = vmatpush1.bf16.msra.mxu0 %v1451
    %1927 = vmatprep.subr.bf16.mxu0 %v1456
    %1928 = vmatpush1.bf16.msra.mxu0 %v1455
    %1929 = vmatprep.subr.bf16.mxu0 %v1460
    %1930 = vmatpush1.bf16.msra.mxu0 %v1459
    %1931 = vmatprep.subr.bf16.mxu0 %v1464
    %1932 = vmatpush1.bf16.msra.mxu0 %v1463
    %1933 = vmatprep.subr.bf16.mxu0 %v1468
    %1934 = vmatpush1.bf16.msra.mxu0 %v1467
    %1935 = vmatprep.subr.bf16.mxu0 %v1472
    %1936 = vmatpush1.bf16.msra.mxu0 %v1471
    %1937 = vmatprep.subr.bf16.mxu0 %v1476
    %1938 = vmatpush1.bf16.msra.mxu0 %v1475
    %1939 = vmatprep.subr.bf16.mxu0 %v1480
    %1940 = vmatpush1.bf16.msra.mxu0 %v1479
    %1941 = vmatprep.mubr.bf16.mxu0 %v560
    %1942 = vmatmul.mubr.bf16.gmra.mrb[0].mxu0 %v559
    %v1943 = vpop.f32.mrb[0].mxu0
    %v1944 = vadd.f32 %v1901, %v1943
    %v1945 = vpop.f32.mrb[0].mxu0
    %v1946 = vadd.f32 %v1903, %v1945
    %v1947 = vpop.f32.mrb[0].mxu0
    %v1948 = vadd.f32 %v1905, %v1947
    %v1949 = vpop.f32.mrb[0].mxu0
    %v1950 = vadd.f32 %v1907, %v1949
    %1951 = vdwg.mxu0
    %1952 = vmatprep.subr.bf16.mxu0 %v1484
    %1953 = vmatpush1.bf16.msra.mxu0 %v1483
    %1954 = vmatprep.subr.bf16.mxu0 %v1488
    %1955 = vmatpush1.bf16.msra.mxu0 %v1487
    %1956 = vmatprep.subr.bf16.mxu0 %v1492
    %1957 = vmatpush1.bf16.msra.mxu0 %v1491
    %1958 = vmatprep.subr.bf16.mxu0 %v1496
    %1959 = vmatpush1.bf16.msra.mxu0 %v1495
    %1960 = vmatprep.subr.bf16.mxu0 %v1500
    %1961 = vmatpush1.bf16.msra.mxu0 %v1499
    %1962 = vmatprep.subr.bf16.mxu0 %v1504
    %1963 = vmatpush1.bf16.msra.mxu0 %v1503
    %1964 = vmatprep.subr.bf16.mxu0 %v1508
    %1965 = vmatpush1.bf16.msra.mxu0 %v1507
    %1966 = vmatprep.subr.bf16.mxu0 %v1512
    %1967 = vmatpush1.bf16.msra.mxu0 %v1511
    %1968 = vmatprep.subr.bf16.mxu0 %v1516
    %1969 = vmatpush1.bf16.msra.mxu0 %v1515
    %1970 = vmatprep.subr.bf16.mxu0 %v1520
    %1971 = vmatpush1.bf16.msra.mxu0 %v1519
    %1972 = vmatprep.subr.bf16.mxu0 %v1524
    %1973 = vmatpush1.bf16.msra.mxu0 %v1523
    %1974 = vmatprep.subr.bf16.mxu0 %v1528
    %1975 = vmatpush1.bf16.msra.mxu0 %v1527
    %1976 = vmatprep.subr.bf16.mxu0 %v1532
    %1977 = vmatpush1.bf16.msra.mxu0 %v1531
    %1978 = vmatprep.subr.bf16.mxu0 %v1536
    %1979 = vmatpush1.bf16.msra.mxu0 %v1535
    %1980 = vmatprep.subr.bf16.mxu0 %v1540
    %1981 = vmatpush1.bf16.msra.mxu0 %v1539
    %1982 = vmatprep.subr.bf16.mxu0 %v1544
    %1983 = vmatpush1.bf16.msra.mxu0 %v1543
    %1984 = vmatprep.mubr.bf16.mxu0 %v562
    %1985 = vmatmul.mubr.bf16.gmra.mrb[0].mxu0 %v561
    %v1986 = vpop.f32.mrb[0].mxu0
    %v1987 = vadd.f32 %v1944, %v1986
    %v1988 = vpop.f32.mrb[0].mxu0
    %v1989 = vadd.f32 %v1946, %v1988
    %v1990 = vpop.f32.mrb[0].mxu0
    %v1991 = vadd.f32 %v1948, %v1990
    %v1992 = vpop.f32.mrb[0].mxu0
    %v1993 = vadd.f32 %v1950, %v1992
    %1994 = vdwg.mxu0
    %v1995 = vmax.f32 %v1858, 0.0
    %v1996 = vmax.f32 %v1860, 0.0
    %v1997 = vmax.f32 %v1987, 0.0
    %v1998 = vmax.f32 %v1989, 0.0
    %v1999 = vmax.f32 %v1862, 0.0
    %v2000 = vmax.f32 %v1864, 0.0
    %v2001 = vmax.f32 %v1991, 0.0
    %v2002 = vmax.f32 %v1993, 0.0
    %v2003 = vmax.f32 %v1995, %v1999
    %v2004 = vmax.f32 %v1996, %v2000
    %v2005 = vmax.f32 %v1997, %v2001
    %v2006 = vmax.f32 %v1998, %v2002
    %v2007 = vmax.f32 %v2003, %v2005
    %v2008 = vmax.f32 %v2004, %v2006
    %v2011 = vcombine.low %v2007, %v2008
    %v2013 = vunpack.c.l.s4 1966171168
    %v2014 = vunpack.c.0.s8 %v2013
    %v2015 = vlaneseq
    %v2016 = vshrl.u32 %v2015, 7
    %v2017 = vsub.s32 %v2014, %v2016
    %v2018 = vrot.slane %v2011, %v2017
    %v2020 = vunpack.c.l.s4 1966171168
    %v2021 = vunpack.c.0.s8 %v2020
    %v2022 = vlaneseq
    %v2023 = vshrl.u32 %v2022, 7
    %v2024 = vsub.s32 %v2021, %v2023
    %v2025 = vrot.slane %v2018, %v2024
    %2027 = vst.msk [vmem:[#allocation3] ss:$2 sm:$0x3] %vm481, %v2025
    %v2028 = vcombine.high %v2018, %v2018
    %v2030 = vunpack.c.l.s4 1966171168
    %v2031 = vunpack.c.0.s8 %v2030
    %v2032 = vlaneseq
    %v2033 = vshrl.u32 %v2032, 7
    %v2034 = vsub.s32 %v2031, %v2033
    %v2035 = vrot.slane %v2028, %v2034
    %s2037 = scalar_lea.vmem [#allocation3], 4
    %2038 = vst.msk [vmem:[%s2037] ss:$2 sm:$0x3] %vm481, %v2035
    %v2039 = vcombine.high %v2025, %v2025
    %s2041 = scalar_lea.vmem [#allocation3], 8
    %2042 = vst.msk [vmem:[%s2041] ss:$2 sm:$0x3] %vm481, %v2039
    %v2043 = vcombine.high %v2035, %v2035
    %s2045 = scalar_lea.vmem [#allocation3], 12
    %2046 = vst.msk [vmem:[%s2045] ss:$2 sm:$0x3] %vm481, %v2043
    %v2047 = vcombine.high %v2007, %v2008
    %v2049 = vunpack.c.l.s4 1966171168
    %v2050 = vunpack.c.0.s8 %v2049
    %v2051 = vlaneseq
    %v2052 = vshrl.u32 %v2051, 7
    %v2053 = vsub.s32 %v2050, %v2052
    %v2054 = vrot.slane %v2047, %v2053
    %v2056 = vunpack.c.l.s4 1966171168
    %v2057 = vunpack.c.0.s8 %v2056
    %v2058 = vlaneseq
    %v2059 = vshrl.u32 %v2058, 7
    %v2060 = vsub.s32 %v2057, %v2059
    %v2061 = vrot.slane %v2054, %v2060
    %s2063 = scalar_lea.vmem [#allocation3], 1
    %2064 = vst.msk [vmem:[%s2063] ss:$2 sm:$0x3] %vm481, %v2061
    %v2065 = vcombine.high %v2054, %v2054
    %v2067 = vunpack.c.l.s4 1966171168
    %v2068 = vunpack.c.0.s8 %v2067
    %v2069 = vlaneseq
    %v2070 = vshrl.u32 %v2069, 7
    %v2071 = vsub.s32 %v2068, %v2070
    %v2072 = vrot.slane %v2065, %v2071
    %s2074 = scalar_lea.vmem [#allocation3], 5
    %2075 = vst.msk [vmem:[%s2074] ss:$2 sm:$0x3] %vm481, %v2072
    %v2076 = vcombine.high %v2061, %v2061
    %s2078 = scalar_lea.vmem [#allocation3], 9
    %2079 = vst.msk [vmem:[%s2078] ss:$2 sm:$0x3] %vm481, %v2076
    %v2080 = vcombine.high %v2072, %v2072
    %s2082 = scalar_lea.vmem [#allocation3], 13
    %2083 = vst.msk [vmem:[%s2082] ss:$2 sm:$0x3] %vm481, %v2080
    %v2084 = vld [vmem:[#allocation3] sm:$0xff]
    %v2085 = vld [vmem:[#allocation3 + $0x8] sm:$0xff]
    %v2086 = vld [vmem:[%s5] sm:$0xff]
    %v2087 = vld [vmem:[%s5 + $0x8] sm:$0xff]
    %v2088 = vld [vmem:[%s5 + $0x10] sm:$0xff]
    %v2089 = vld [vmem:[%s5 + $0x18] sm:$0xff]
    %v2090 = vld [vmem:[%s5 + $0x20] sm:$0xff]
    %v2091 = vld [vmem:[%s5 + $0x28] sm:$0xff]
    %v2092 = vld [vmem:[%s5 + $0x30] sm:$0xff]
    %v2093 = vld [vmem:[%s5 + $0x38] sm:$0xff]
    %v2094 = vld [vmem:[%s5 + $0x40] sm:$0xff]
    %v2095 = vld [vmem:[%s5 + $0x48] sm:$0xff]
    %v2096 = vld [vmem:[%s5 + $0x50] sm:$0xff]
    %v2097 = vld [vmem:[%s5 + $0x58] sm:$0xff]
    %v2098 = vld [vmem:[%s5 + $0x60] sm:$0xff]
    %v2099 = vld [vmem:[%s5 + $0x68] sm:$0xff]
    %v2100 = vld [vmem:[%s5 + $0x70] sm:$0xff]
    %v2101 = vld [vmem:[%s5 + $0x78] sm:$0xff]
    %v2102 = vld [vmem:[%s5 + $0x80] sm:$0xff]
    %v2103 = vld [vmem:[%s5 + $0x88] sm:$0xff]
    %v2104 = vld [vmem:[%s5 + $0x90] sm:$0xff]
    %v2105 = vld [vmem:[%s5 + $0x98] sm:$0xff]
    %v2106 = vld [vmem:[%s5 + $0xa0] sm:$0xff]
    %v2107 = vld [vmem:[%s5 + $0xa8] sm:$0xff]
    %v2108 = vld [vmem:[%s5 + $0xb0] sm:$0xff]
    %v2109 = vld [vmem:[%s5 + $0xb8] sm:$0xff]
    %v2110 = vld [vmem:[%s5 + $0xc0] sm:$0xff]
    %v2111 = vld [vmem:[%s5 + $0xc8] sm:$0xff]
    %v2112 = vld [vmem:[%s5 + $0xd0] sm:$0xff]
    %v2113 = vld [vmem:[%s5 + $0xd8] sm:$0xff]
    %v2114 = vld [vmem:[%s5 + $0xe0] sm:$0xff]
    %v2115 = vld [vmem:[%s5 + $0xe8] sm:$0xff]
    %v2116 = vld [vmem:[%s5 + $0xf0] sm:$0xff]
    %v2117 = vld [vmem:[%s5 + $0xf8] sm:$0xff]
    %v2118 = vld [vmem:[%s5 + $0x100] sm:$0xff]
    %v2119 = vld [vmem:[%s5 + $0x108] sm:$0xff]
    %v2120 = vld [vmem:[%s5 + $0x110] sm:$0xff]
    %v2121 = vld [vmem:[%s5 + $0x118] sm:$0xff]
    %v2122 = vld [vmem:[%s5 + $0x120] sm:$0xff]
    %v2123 = vld [vmem:[%s5 + $0x128] sm:$0xff]
    %v2124 = vld [vmem:[%s5 + $0x130] sm:$0xff]
    %v2125 = vld [vmem:[%s5 + $0x138] sm:$0xff]
    %v2126 = vld [vmem:[%s5 + $0x140] sm:$0xff]
    %v2127 = vld [vmem:[%s5 + $0x148] sm:$0xff]
    %v2128 = vld [vmem:[%s5 + $0x150] sm:$0xff]
    %v2129 = vld [vmem:[%s5 + $0x158] sm:$0xff]
    %v2130 = vld [vmem:[%s5 + $0x160] sm:$0xff]
    %v2131 = vld [vmem:[%s5 + $0x168] sm:$0xff]
    %v2132 = vld [vmem:[%s5 + $0x170] sm:$0xff]
    %v2133 = vld [vmem:[%s5 + $0x178] sm:$0xff]
    %v2134 = vld [vmem:[%s5 + $0x180] sm:$0xff]
    %v2135 = vld [vmem:[%s5 + $0x188] sm:$0xff]
    %v2136 = vld [vmem:[%s5 + $0x190] sm:$0xff]
    %v2137 = vld [vmem:[%s5 + $0x198] sm:$0xff]
    %v2138 = vld [vmem:[%s5 + $0x1a0] sm:$0xff]
    %v2139 = vld [vmem:[%s5 + $0x1a8] sm:$0xff]
    %v2140 = vld [vmem:[%s5 + $0x1b0] sm:$0xff]
    %v2141 = vld [vmem:[%s5 + $0x1b8] sm:$0xff]
    %v2142 = vld [vmem:[%s5 + $0x1c0] sm:$0xff]
    %v2143 = vld [vmem:[%s5 + $0x1c8] sm:$0xff]
    %v2144 = vld [vmem:[%s5 + $0x1d0] sm:$0xff]
    %v2145 = vld [vmem:[%s5 + $0x1d8] sm:$0xff]
    %v2146 = vld [vmem:[%s5 + $0x1e0] sm:$0xff]
    %v2147 = vld [vmem:[%s5 + $0x1e8] sm:$0xff]
    %v2148 = vld [vmem:[%s5 + $0x1f0] sm:$0xff]
    %v2149 = vld [vmem:[%s5 + $0x1f8] sm:$0xff]
    %v2150 = vld [vmem:[%s5 + $0x200] sm:$0xff]
    %v2151 = vld [vmem:[%s5 + $0x208] sm:$0xff]
    %v2152 = vld [vmem:[%s5 + $0x210] sm:$0xff]
    %v2153 = vld [vmem:[%s5 + $0x218] sm:$0xff]
    %v2154 = vld [vmem:[%s5 + $0x220] sm:$0xff]
    %v2155 = vld [vmem:[%s5 + $0x228] sm:$0xff]
    %v2156 = vld [vmem:[%s5 + $0x230] sm:$0xff]
    %v2157 = vld [vmem:[%s5 + $0x238] sm:$0xff]
    %v2158 = vld [vmem:[%s5 + $0x240] sm:$0xff]
    %v2159 = vld [vmem:[%s5 + $0x248] sm:$0xff]
    %v2160 = vld [vmem:[%s5 + $0x250] sm:$0xff]
    %v2161 = vld [vmem:[%s5 + $0x258] sm:$0xff]
    %v2162 = vld [vmem:[%s5 + $0x260] sm:$0xff]
    %v2163 = vld [vmem:[%s5 + $0x268] sm:$0xff]
    %v2164 = vld [vmem:[%s5 + $0x270] sm:$0xff]
    %v2165 = vld [vmem:[%s5 + $0x278] sm:$0xff]
    %v2166 = vld [vmem:[%s5 + $0x280] sm:$0xff]
    %v2167 = vld [vmem:[%s5 + $0x288] sm:$0xff]
    %v2168 = vld [vmem:[%s5 + $0x290] sm:$0xff]
    %v2169 = vld [vmem:[%s5 + $0x298] sm:$0xff]
    %v2170 = vld [vmem:[%s5 + $0x2a0] sm:$0xff]
    %v2171 = vld [vmem:[%s5 + $0x2a8] sm:$0xff]
    %v2172 = vld [vmem:[%s5 + $0x2b0] sm:$0xff]
    %v2173 = vld [vmem:[%s5 + $0x2b8] sm:$0xff]
    %v2174 = vld [vmem:[%s5 + $0x2c0] sm:$0xff]
    %v2175 = vld [vmem:[%s5 + $0x2c8] sm:$0xff]
    %v2176 = vld [vmem:[%s5 + $0x2d0] sm:$0xff]
    %v2177 = vld [vmem:[%s5 + $0x2d8] sm:$0xff]
    %v2178 = vld [vmem:[%s5 + $0x2e0] sm:$0xff]
    %v2179 = vld [vmem:[%s5 + $0x2e8] sm:$0xff]
    %v2180 = vld [vmem:[%s5 + $0x2f0] sm:$0xff]
    %v2181 = vld [vmem:[%s5 + $0x2f8] sm:$0xff]
    %v2182 = vld [vmem:[%s5 + $0x300] sm:$0xff]
    %v2183 = vld [vmem:[%s5 + $0x308] sm:$0xff]
    %v2184 = vld [vmem:[%s5 + $0x310] sm:$0xff]
    %v2185 = vld [vmem:[%s5 + $0x318] sm:$0xff]
    %v2186 = vld [vmem:[%s5 + $0x320] sm:$0xff]
    %v2187 = vld [vmem:[%s5 + $0x328] sm:$0xff]
    %v2188 = vld [vmem:[%s5 + $0x330] sm:$0xff]
    %v2189 = vld [vmem:[%s5 + $0x338] sm:$0xff]
    %v2190 = vld [vmem:[%s5 + $0x340] sm:$0xff]
    %v2191 = vld [vmem:[%s5 + $0x348] sm:$0xff]
    %v2192 = vld [vmem:[%s5 + $0x350] sm:$0xff]
    %v2193 = vld [vmem:[%s5 + $0x358] sm:$0xff]
    %v2194 = vld [vmem:[%s5 + $0x360] sm:$0xff]
    %v2195 = vld [vmem:[%s5 + $0x368] sm:$0xff]
    %v2196 = vld [vmem:[%s5 + $0x370] sm:$0xff]
    %v2197 = vld [vmem:[%s5 + $0x378] sm:$0xff]
    %v2198 = vld [vmem:[%s5 + $0x380] sm:$0xff]
    %v2199 = vld [vmem:[%s5 + $0x388] sm:$0xff]
    %v2200 = vld [vmem:[%s5 + $0x390] sm:$0xff]
    %v2201 = vld [vmem:[%s5 + $0x398] sm:$0xff]
    %v2202 = vld [vmem:[%s5 + $0x3a0] sm:$0xff]
    %v2203 = vld [vmem:[%s5 + $0x3a8] sm:$0xff]
    %v2204 = vld [vmem:[%s5 + $0x3b0] sm:$0xff]
    %v2205 = vld [vmem:[%s5 + $0x3b8] sm:$0xff]
    %v2206 = vld [vmem:[%s5 + $0x3c0] sm:$0xff]
    %v2207 = vld [vmem:[%s5 + $0x3c8] sm:$0xff]
    %v2208 = vld [vmem:[%s5 + $0x3d0] sm:$0xff]
    %v2209 = vld [vmem:[%s5 + $0x3d8] sm:$0xff]
    %v2210 = vld [vmem:[%s5 + $0x3e0] sm:$0xff]
    %v2211 = vld [vmem:[%s5 + $0x3e8] sm:$0xff]
    %v2212 = vld [vmem:[%s5 + $0x3f0] sm:$0xff]
    %v2213 = vld [vmem:[%s5 + $0x3f8] sm:$0xff]
    %v2214 = vld [vmem:[%s6] sm:$0x1]
    %v2216 = vlaneseq
    %v2217 = vshrl.u32 %v2216, 7
    %v2218 = vsub.s32 0, %v2217
    %v2219 = vrot.slane %v2214, %v2218
    %v2223 = vcombine.high %v2084, %v2084
    %v2225 = vunpack.c.l.s4 1983009808
    %v2226 = vunpack.c.0.s8 %v2225
    %v2227 = vlaneseq
    %v2228 = vshrl.u32 %v2227, 7
    %v2229 = vsub.s32 %v2226, %v2228
    %v2230 = vrot.slane %v2084, %v2229
    %v2232 = vunpack.c.l.s4 1983009808
    %v2233 = vunpack.c.0.s8 %v2232
    %v2234 = vlaneseq
    %v2235 = vshrl.u32 %v2234, 7
    %v2236 = vsub.s32 %v2233, %v2235
    %v2237 = vrot.slane %v2223, %v2236
    %v2238 = vcombine.high %v2230, %v2230
    %v2239 = vcombine.high %v2237, %v2237
    %v2240 = vcombine.high %v2085, %v2085
    %v2242 = vunpack.c.l.s4 1983009808
    %v2243 = vunpack.c.0.s8 %v2242
    %v2244 = vlaneseq
    %v2245 = vshrl.u32 %v2244, 7
    %v2246 = vsub.s32 %v2243, %v2245
    %v2247 = vrot.slane %v2085, %v2246
    %v2249 = vunpack.c.l.s4 1983009808
    %v2250 = vunpack.c.0.s8 %v2249
    %v2251 = vlaneseq
    %v2252 = vshrl.u32 %v2251, 7
    %v2253 = vsub.s32 %v2250, %v2252
    %v2254 = vrot.slane %v2240, %v2253
    %v2255 = vcombine.high %v2247, %v2247
    %v2256 = vcombine.high %v2254, %v2254
    %2265 = vmatprep.subr.mxu0 0.0
    %2266 = vmatpush1.msra.mxu0 %v2086
    %2267 = vmatprep.subr.mxu0 0.0
    %2268 = vmatpush1.msra.mxu0 %v2087
    %2269 = vmatprep.subr.mxu0 0.0
    %2270 = vmatpush1.msra.mxu0 %v2088
    %2271 = vmatprep.subr.mxu0 0.0
    %2272 = vmatpush1.msra.mxu0 %v2089
    %2273 = vmatprep.subr.mxu0 0.0
    %2274 = vmatpush1.msra.mxu0 %v2090
    %2275 = vmatprep.subr.mxu0 0.0
    %2276 = vmatpush1.msra.mxu0 %v2091
    %2277 = vmatprep.subr.mxu0 0.0
    %2278 = vmatpush1.msra.mxu0 %v2092
    %2279 = vmatprep.subr.mxu0 0.0
    %2280 = vmatpush1.msra.mxu0 %v2093
    %2281 = vmatprep.subr.mxu0 0.0
    %2282 = vmatpush1.msra.mxu0 %v2094
    %2283 = vmatprep.subr.mxu0 0.0
    %2284 = vmatpush1.msra.mxu0 %v2095
    %2285 = vmatprep.subr.mxu0 0.0
    %2286 = vmatpush1.msra.mxu0 %v2096
    %2287 = vmatprep.subr.mxu0 0.0
    %2288 = vmatpush1.msra.mxu0 %v2097
    %2289 = vmatprep.subr.mxu0 0.0
    %2290 = vmatpush1.msra.mxu0 %v2098
    %2291 = vmatprep.subr.mxu0 0.0
    %2292 = vmatpush1.msra.mxu0 %v2099
    %2293 = vmatprep.subr.mxu0 0.0
    %2294 = vmatpush1.msra.mxu0 %v2100
    %2295 = vmatprep.subr.mxu0 0.0
    %2296 = vmatpush1.msra.mxu0 %v2101
    %2297 = vmatprep.subr.mxu0 0.0
    %2298 = vmatpush1.msra.mxu0 %v2102
    %2299 = vmatprep.subr.mxu0 0.0
    %2300 = vmatpush1.msra.mxu0 %v2103
    %2301 = vmatprep.subr.mxu0 0.0
    %2302 = vmatpush1.msra.mxu0 %v2104
    %2303 = vmatprep.subr.mxu0 0.0
    %2304 = vmatpush1.msra.mxu0 %v2105
    %2305 = vmatprep.subr.mxu0 0.0
    %2306 = vmatpush1.msra.mxu0 %v2106
    %2307 = vmatprep.subr.mxu0 0.0
    %2308 = vmatpush1.msra.mxu0 %v2107
    %2309 = vmatprep.subr.mxu0 0.0
    %2310 = vmatpush1.msra.mxu0 %v2108
    %2311 = vmatprep.subr.mxu0 0.0
    %2312 = vmatpush1.msra.mxu0 %v2109
    %2313 = vmatprep.subr.mxu0 0.0
    %2314 = vmatpush1.msra.mxu0 %v2110
    %2315 = vmatprep.subr.mxu0 0.0
    %2316 = vmatpush1.msra.mxu0 %v2111
    %2317 = vmatprep.subr.mxu0 0.0
    %2318 = vmatpush1.msra.mxu0 %v2112
    %2319 = vmatprep.subr.mxu0 0.0
    %2320 = vmatpush1.msra.mxu0 %v2113
    %2321 = vmatprep.subr.mxu0 0.0
    %2322 = vmatpush1.msra.mxu0 %v2114
    %2323 = vmatprep.subr.mxu0 0.0
    %2324 = vmatpush1.msra.mxu0 %v2115
    %2325 = vmatprep.subr.mxu0 0.0
    %2326 = vmatpush1.msra.mxu0 %v2116
    %2327 = vmatprep.subr.mxu0 0.0
    %2328 = vmatpush1.msra.mxu0 %v2117
    %2329 = vmatprep.mubr.f32.mxu0 %v2238
    %2330 = vmatmul.mubr.f32.gmra.mrb[0].mxu0 %v2230
    %v2331 = vpop.f32.mrb[0].mxu0
    %v2332 = vadd.f32 %v2219, %v2331
    %v2333 = vpop.f32.mrb[0].mxu0
    %2334 = vdwg.mxu0
    %2335 = vmatprep.subr.mxu0 0.0
    %2336 = vmatpush1.msra.mxu0 %v2118
    %2337 = vmatprep.subr.mxu0 0.0
    %2338 = vmatpush1.msra.mxu0 %v2119
    %2339 = vmatprep.subr.mxu0 0.0
    %2340 = vmatpush1.msra.mxu0 %v2120
    %2341 = vmatprep.subr.mxu0 0.0
    %2342 = vmatpush1.msra.mxu0 %v2121
    %2343 = vmatprep.subr.mxu0 0.0
    %2344 = vmatpush1.msra.mxu0 %v2122
    %2345 = vmatprep.subr.mxu0 0.0
    %2346 = vmatpush1.msra.mxu0 %v2123
    %2347 = vmatprep.subr.mxu0 0.0
    %2348 = vmatpush1.msra.mxu0 %v2124
    %2349 = vmatprep.subr.mxu0 0.0
    %2350 = vmatpush1.msra.mxu0 %v2125
    %2351 = vmatprep.subr.mxu0 0.0
    %2352 = vmatpush1.msra.mxu0 %v2126
    %2353 = vmatprep.subr.mxu0 0.0
    %2354 = vmatpush1.msra.mxu0 %v2127
    %2355 = vmatprep.subr.mxu0 0.0
    %2356 = vmatpush1.msra.mxu0 %v2128
    %2357 = vmatprep.subr.mxu0 0.0
    %2358 = vmatpush1.msra.mxu0 %v2129
    %2359 = vmatprep.subr.mxu0 0.0
    %2360 = vmatpush1.msra.mxu0 %v2130
    %2361 = vmatprep.subr.mxu0 0.0
    %2362 = vmatpush1.msra.mxu0 %v2131
    %2363 = vmatprep.subr.mxu0 0.0
    %2364 = vmatpush1.msra.mxu0 %v2132
    %2365 = vmatprep.subr.mxu0 0.0
    %2366 = vmatpush1.msra.mxu0 %v2133
    %2367 = vmatprep.subr.mxu0 0.0
    %2368 = vmatpush1.msra.mxu0 %v2134
    %2369 = vmatprep.subr.mxu0 0.0
    %2370 = vmatpush1.msra.mxu0 %v2135
    %2371 = vmatprep.subr.mxu0 0.0
    %2372 = vmatpush1.msra.mxu0 %v2136
    %2373 = vmatprep.subr.mxu0 0.0
    %2374 = vmatpush1.msra.mxu0 %v2137
    %2375 = vmatprep.subr.mxu0 0.0
    %2376 = vmatpush1.msra.mxu0 %v2138
    %2377 = vmatprep.subr.mxu0 0.0
    %2378 = vmatpush1.msra.mxu0 %v2139
    %2379 = vmatprep.subr.mxu0 0.0
    %2380 = vmatpush1.msra.mxu0 %v2140
    %2381 = vmatprep.subr.mxu0 0.0
    %2382 = vmatpush1.msra.mxu0 %v2141
    %2383 = vmatprep.subr.mxu0 0.0
    %2384 = vmatpush1.msra.mxu0 %v2142
    %2385 = vmatprep.subr.mxu0 0.0
    %2386 = vmatpush1.msra.mxu0 %v2143
    %2387 = vmatprep.subr.mxu0 0.0
    %2388 = vmatpush1.msra.mxu0 %v2144
    %2389 = vmatprep.subr.mxu0 0.0
    %2390 = vmatpush1.msra.mxu0 %v2145
    %2391 = vmatprep.subr.mxu0 0.0
    %2392 = vmatpush1.msra.mxu0 %v2146
    %2393 = vmatprep.subr.mxu0 0.0
    %2394 = vmatpush1.msra.mxu0 %v2147
    %2395 = vmatprep.subr.mxu0 0.0
    %2396 = vmatpush1.msra.mxu0 %v2148
    %2397 = vmatprep.subr.mxu0 0.0
    %2398 = vmatpush1.msra.mxu0 %v2149
    %2399 = vmatprep.mubr.f32.mxu0 %v2239
    %2400 = vmatmul.mubr.f32.gmra.mrb[0].mxu0 %v2237
    %v2401 = vpop.f32.mrb[0].mxu0
    %v2402 = vadd.f32 %v2332, %v2401
    %v2403 = vpop.f32.mrb[0].mxu0
    %2404 = vdwg.mxu0
    %2405 = vmatprep.subr.mxu0 0.0
    %2406 = vmatpush1.msra.mxu0 %v2150
    %2407 = vmatprep.subr.mxu0 0.0
    %2408 = vmatpush1.msra.mxu0 %v2151
    %2409 = vmatprep.subr.mxu0 0.0
    %2410 = vmatpush1.msra.mxu0 %v2152
    %2411 = vmatprep.subr.mxu0 0.0
    %2412 = vmatpush1.msra.mxu0 %v2153
    %2413 = vmatprep.subr.mxu0 0.0
    %2414 = vmatpush1.msra.mxu0 %v2154
    %2415 = vmatprep.subr.mxu0 0.0
    %2416 = vmatpush1.msra.mxu0 %v2155
    %2417 = vmatprep.subr.mxu0 0.0
    %2418 = vmatpush1.msra.mxu0 %v2156
    %2419 = vmatprep.subr.mxu0 0.0
    %2420 = vmatpush1.msra.mxu0 %v2157
    %2421 = vmatprep.subr.mxu0 0.0
    %2422 = vmatpush1.msra.mxu0 %v2158
    %2423 = vmatprep.subr.mxu0 0.0
    %2424 = vmatpush1.msra.mxu0 %v2159
    %2425 = vmatprep.subr.mxu0 0.0
    %2426 = vmatpush1.msra.mxu0 %v2160
    %2427 = vmatprep.subr.mxu0 0.0
    %2428 = vmatpush1.msra.mxu0 %v2161
    %2429 = vmatprep.subr.mxu0 0.0
    %2430 = vmatpush1.msra.mxu0 %v2162
    %2431 = vmatprep.subr.mxu0 0.0
    %2432 = vmatpush1.msra.mxu0 %v2163
    %2433 = vmatprep.subr.mxu0 0.0
    %2434 = vmatpush1.msra.mxu0 %v2164
    %2435 = vmatprep.subr.mxu0 0.0
    %2436 = vmatpush1.msra.mxu0 %v2165
    %2437 = vmatprep.subr.mxu0 0.0
    %2438 = vmatpush1.msra.mxu0 %v2166
    %2439 = vmatprep.subr.mxu0 0.0
    %2440 = vmatpush1.msra.mxu0 %v2167
    %2441 = vmatprep.subr.mxu0 0.0
    %2442 = vmatpush1.msra.mxu0 %v2168
    %2443 = vmatprep.subr.mxu0 0.0
    %2444 = vmatpush1.msra.mxu0 %v2169
    %2445 = vmatprep.subr.mxu0 0.0
    %2446 = vmatpush1.msra.mxu0 %v2170
    %2447 = vmatprep.subr.mxu0 0.0
    %2448 = vmatpush1.msra.mxu0 %v2171
    %2449 = vmatprep.subr.mxu0 0.0
    %2450 = vmatpush1.msra.mxu0 %v2172
    %2451 = vmatprep.subr.mxu0 0.0
    %2452 = vmatpush1.msra.mxu0 %v2173
    %2453 = vmatprep.subr.mxu0 0.0
    %2454 = vmatpush1.msra.mxu0 %v2174
    %2455 = vmatprep.subr.mxu0 0.0
    %2456 = vmatpush1.msra.mxu0 %v2175
    %2457 = vmatprep.subr.mxu0 0.0
    %2458 = vmatpush1.msra.mxu0 %v2176
    %2459 = vmatprep.subr.mxu0 0.0
    %2460 = vmatpush1.msra.mxu0 %v2177
    %2461 = vmatprep.subr.mxu0 0.0
    %2462 = vmatpush1.msra.mxu0 %v2178
    %2463 = vmatprep.subr.mxu0 0.0
    %2464 = vmatpush1.msra.mxu0 %v2179
    %2465 = vmatprep.subr.mxu0 0.0
    %2466 = vmatpush1.msra.mxu0 %v2180
    %2467 = vmatprep.subr.mxu0 0.0
    %2468 = vmatpush1.msra.mxu0 %v2181
    %2469 = vmatprep.mubr.f32.mxu0 %v2255
    %2470 = vmatmul.mubr.f32.gmra.mrb[0].mxu0 %v2247
    %v2471 = vpop.f32.mrb[0].mxu0
    %v2472 = vadd.f32 %v2402, %v2471
    %v2473 = vpop.f32.mrb[0].mxu0
    %2474 = vdwg.mxu0
    %2475 = vmatprep.subr.mxu0 0.0
    %2476 = vmatpush1.msra.mxu0 %v2182
    %2477 = vmatprep.subr.mxu0 0.0
    %2478 = vmatpush1.msra.mxu0 %v2183
    %2479 = vmatprep.subr.mxu0 0.0
    %2480 = vmatpush1.msra.mxu0 %v2184
    %2481 = vmatprep.subr.mxu0 0.0
    %2482 = vmatpush1.msra.mxu0 %v2185
    %2483 = vmatprep.subr.mxu0 0.0
    %2484 = vmatpush1.msra.mxu0 %v2186
    %2485 = vmatprep.subr.mxu0 0.0
    %2486 = vmatpush1.msra.mxu0 %v2187
    %2487 = vmatprep.subr.mxu0 0.0
    %2488 = vmatpush1.msra.mxu0 %v2188
    %2489 = vmatprep.subr.mxu0 0.0
    %2490 = vmatpush1.msra.mxu0 %v2189
    %2491 = vmatprep.subr.mxu0 0.0
    %2492 = vmatpush1.msra.mxu0 %v2190
    %2493 = vmatprep.subr.mxu0 0.0
    %2494 = vmatpush1.msra.mxu0 %v2191
    %2495 = vmatprep.subr.mxu0 0.0
    %2496 = vmatpush1.msra.mxu0 %v2192
    %2497 = vmatprep.subr.mxu0 0.0
    %2498 = vmatpush1.msra.mxu0 %v2193
    %2499 = vmatprep.subr.mxu0 0.0
    %2500 = vmatpush1.msra.mxu0 %v2194
    %2501 = vmatprep.subr.mxu0 0.0
    %2502 = vmatpush1.msra.mxu0 %v2195
    %2503 = vmatprep.subr.mxu0 0.0
    %2504 = vmatpush1.msra.mxu0 %v2196
    %2505 = vmatprep.subr.mxu0 0.0
    %2506 = vmatpush1.msra.mxu0 %v2197
    %2507 = vmatprep.subr.mxu0 0.0
    %2508 = vmatpush1.msra.mxu0 %v2198
    %2509 = vmatprep.subr.mxu0 0.0
    %2510 = vmatpush1.msra.mxu0 %v2199
    %2511 = vmatprep.subr.mxu0 0.0
    %2512 = vmatpush1.msra.mxu0 %v2200
    %2513 = vmatprep.subr.mxu0 0.0
    %2514 = vmatpush1.msra.mxu0 %v2201
    %2515 = vmatprep.subr.mxu0 0.0
    %2516 = vmatpush1.msra.mxu0 %v2202
    %2517 = vmatprep.subr.mxu0 0.0
    %2518 = vmatpush1.msra.mxu0 %v2203
    %2519 = vmatprep.subr.mxu0 0.0
    %2520 = vmatpush1.msra.mxu0 %v2204
    %2521 = vmatprep.subr.mxu0 0.0
    %2522 = vmatpush1.msra.mxu0 %v2205
    %2523 = vmatprep.subr.mxu0 0.0
    %2524 = vmatpush1.msra.mxu0 %v2206
    %2525 = vmatprep.subr.mxu0 0.0
    %2526 = vmatpush1.msra.mxu0 %v2207
    %2527 = vmatprep.subr.mxu0 0.0
    %2528 = vmatpush1.msra.mxu0 %v2208
    %2529 = vmatprep.subr.mxu0 0.0
    %2530 = vmatpush1.msra.mxu0 %v2209
    %2531 = vmatprep.subr.mxu0 0.0
    %2532 = vmatpush1.msra.mxu0 %v2210
    %2533 = vmatprep.subr.mxu0 0.0
    %2534 = vmatpush1.msra.mxu0 %v2211
    %2535 = vmatprep.subr.mxu0 0.0
    %2536 = vmatpush1.msra.mxu0 %v2212
    %2537 = vmatprep.subr.mxu0 0.0
    %2538 = vmatpush1.msra.mxu0 %v2213
    %2539 = vmatprep.mubr.f32.mxu0 %v2256
    %2540 = vmatmul.mubr.f32.gmra.mrb[0].mxu0 %v2254
    %v2541 = vpop.f32.mrb[0].mxu0
    %v2542 = vadd.f32 %v2472, %v2541
    %v2543 = vpop.f32.mrb[0].mxu0
    %2544 = vdwg.mxu0
    %vm2545 = vcmask 74752
    %2546 = vst.msk [vmem:[#allocation4] sm:$0x3] %vm2545, %v2542
    // Predicated region
    $region30: #{cnn_forward_fused.1} parent=1 // pred_check
      _
    $region31: #{cnn_forward_fused.1} parent=1 // pred_check_branch
      %2548 = sbr.rel (0) target = $region33
    $region32: #{cnn_forward_fused.1} parent=1 // pred_region
      %s2550 = ssub.s32 32, 32
      %2551 = vsyncadd [#allocation5], %s2550
      %s2553 = sshll.u32 [#allocation4], 4
      %s2554 = int_to_ptr.vmem [resolvable:$true] %s2553
      %2556 = dma.vmem_to_hbm [thread:$0]  %s2554, 32, %s7, [#allocation5]
    $region33: #{cnn_forward_fused.1} parent=1 // pred_fallthru
      _
    // Predicated region
    $region34: #{cnn_forward_fused.1} parent=1 // pred_check
      _
    $region35: #{cnn_forward_fused.1} parent=1 // pred_check_branch
      %2558 = sbr.rel (0) target = $region37
    $region36: #{cnn_forward_fused.1} parent=1 // pred_region
      %2559 = dma.done [#allocation5], 32
    $region37: #{cnn_forward_fused.1} parent=1 // pred_fallthru
      _
    %2560 = vsyncpa [#allocation5], 1

</llo_original>
